<compile_context>
chip_gen: v6e
topology: v6e:2x2x1
jax: 0.10.0
libtpu: 0.0.40
codegen_flags: <defaults>
</compile_context>

<pallas_src>
import jax
import jax.numpy as jnp
import numpy as np
from jax import lax
from jax.experimental import pallas as pl
from jax.experimental.pallas import tpu as pltpu

# ---- small synthetic config (real model: D=2048, heads=32, D_OUT=1024) ----
B = 2
W_SP = 7
H_SP = 7
HW = W_SP * H_SP          # 49 spatial tokens
D = 128                   # feature dim  (stands in for 2048)
NUM_HEADS = 4
HEAD_DIM = D // NUM_HEADS
D_OUT = D // 2            # attn-pool output dim (stands in for 1024)
NUM_CLASSES = 10
TOKENS = HW + 1           # 50 (mean token + 49 spatial tokens)
SP_PAD = 56               # spatial token rows padded to a sublane multiple (8)
HEADS_PAD = 128           # lane-dense head axis for the score matmuls
C_PAD = 128               # lane-dense classifier / output width
NEG_BIG = -1e30


def _round_up(x, m):
    return (x + m - 1) // m * m


def _attnpool_cls_kernel(tok_ref, lbl_ref, pos0_ref, possp_ref,
                         wqkv0_ref, bqkv0_ref, wkv_ref, bkv_ref,
                         sel_ref, selT_ref, wc_ref, bc_ref, wcls_ref,
                         scale_ref, out_ref):
    """One grid step == img_tile images: attn-pool + normalize + classifier + per-sample CE."""
    img_tile = tok_ref.shape[0]
    rows = img_tile * SP_PAD

    # ---- token assembly in-kernel (mean token + positional embedding); pad rows are zero ----
    sp = tok_ref[...].astype(jnp.float32)                          # (I, 56, D)
    mean_tok = jnp.sum(sp, axis=1) * (1.0 / HW)                    # (I, D)  zeros in pad rows
    tok0 = mean_tok + pos0_ref[...]                                # (I, D)  mean token + pos[0]
    sp_pos = sp + possp_ref[...][None]                             # (I, 56, D)

    # ---- mean-token row: fused scaled-Q | K | V projection (bf16 MXU, f32 acc) ----
    qkv0 = jnp.dot(tok0.astype(jnp.bfloat16), wqkv0_ref[...],
                   preferred_element_type=jnp.float32) + bqkv0_ref[...]      # (I, 3D)
    q = qkv0[:, 0:D]                     # 1/sqrt(HEAD_DIM) already folded into the weights
    k0 = qkv0[:, D:2 * D]
    v0 = qkv0[:, 2 * D:3 * D]

    # ---- spatial rows: K | V only (Q for these rows is never used) ----
    kv = jnp.dot(sp_pos.reshape(rows, D).astype(jnp.bfloat16), wkv_ref[...],
                 preferred_element_type=jnp.float32) + bkv_ref[...]          # (rows, 2D)
    k_sp = kv[:, 0:D].reshape(img_tile, SP_PAD, D)
    v_sp = kv[:, D:2 * D].reshape(img_tile, SP_PAD, D)

    # ---- all heads at once: per-head scores via the constant 0/1 head-selection matmul ----
    s0 = jnp.dot((q * k0).astype(jnp.bfloat16), sel_ref[...],
                 preferred_element_type=jnp.float32)                          # (I, HEADS_PAD)
    s_sp = jnp.dot((q[:, None, :] * k_sp).reshape(rows, D).astype(jnp.bfloat16),
                   sel_ref[...], preferred_element_type=jnp.float32
                   ).reshape(img_tile, SP_PAD, HEADS_PAD)
    trow = lax.broadcasted_iota(jnp.int32, (img_tile, SP_PAD, HEADS_PAD), 1)
    s_sp = jnp.where(trow < HW, s_sp, NEG_BIG)                     # mask padded token rows (f32)

    # ---- softmax over the 50 real tokens (f32 VPU/EUP math) ----
    m = jnp.maximum(jnp.max(s_sp, axis=1), s0)                     # (I, HEADS_PAD)
    e0 = jnp.exp(s0 - m)
    e_sp = jnp.exp(s_sp - m[:, None, :])                           # pad rows underflow to 0
    denom = e0 + jnp.sum(e_sp, axis=1)                             # (I, HEADS_PAD)

    # broadcast per-head values back to that head's lanes (MXU), weight V, deferred normalize
    e0_full = jnp.dot(e0.astype(jnp.bfloat16), selT_ref[...],
                      preferred_element_type=jnp.float32)                     # (I, D)
    esp_full = jnp.dot(e_sp.reshape(rows, HEADS_PAD).astype(jnp.bfloat16),
                       selT_ref[...], preferred_element_type=jnp.float32
                       ).reshape(img_tile, SP_PAD, D)
    num = e0_full * v0 + jnp.sum(esp_full * v_sp, axis=1)          # (I, D)
    inv = pl.reciprocal(denom, approx=True)                        # EUP slot
    inv_full = jnp.dot(inv.astype(jnp.bfloat16), selT_ref[...],
                       preferred_element_type=jnp.float32)         # (I, D)
    attn = num * inv_full

    # ---- attention-pool output projection ----
    pooled = jnp.dot(attn.astype(jnp.bfloat16), wc_ref[...],
                     preferred_element_type=jnp.float32) + bc_ref[...]        # (I, D_OUT)

    # L2 normalize (final / final.norm(dim=-1, keepdim=True)); rsqrt -> EUP slot, f32
    feat = pooled * lax.rsqrt(jnp.sum(pooled * pooled, axis=-1, keepdims=True))

    # eval branch uses raw self.logit_scale (NOT .exp()); scalar read from SMEM
    logit_scale = scale_ref[0, 0]
    logits = logit_scale * jnp.dot(feat.astype(jnp.bfloat16), wcls_ref[...],
                                   preferred_element_type=jnp.float32)        # (I, C_PAD)

    # per-sample cross-entropy (padded class columns masked out of the logsumexp), f32
    col = lax.broadcasted_iota(jnp.int32, (img_tile, C_PAD), 1)
    masked = jnp.where(col < NUM_CLASSES, logits, NEG_BIG)
    lm = jnp.max(masked, axis=-1, keepdims=True)
    lse = lm + jnp.log(jnp.sum(jnp.exp(masked - lm), axis=-1, keepdims=True))
    lbl = lbl_ref[...]                                             # (I, 1) int32
    lbl_logit = jnp.sum(jnp.where(col == lbl, logits, 0.0), axis=-1, keepdims=True)
    nll = lse - lbl_logit                                          # (I, 1)

    # single lane-dense output slab: cols [0, C) = logits, col C = per-sample NLL
    out_ref[...] = jnp.where(col == NUM_CLASSES, nll, logits)


@jax.jit
def object_centric_eval(feats, labels, params):
    """feats: (B, HW, D) output of the (not re-implemented) CLIP image encoder."""
    Bs, N, Ds = feats.shape
    assert (N, Ds) == (HW, D)

    # PyTorch glue, reproduced exactly:
    #   slots.reshape(B, D, 7, 7) -> AttentionPool2d's flatten(2).permute(2, 0, 1)
    # The layout transpose stays in XLA and fuses with the bf16 cast + zero pad into one copy;
    # mean-token / +pos assembly now happens inside the kernel (no extra f32 HBM slab).
    x_nchw = feats.reshape(Bs, Ds, W_SP, H_SP)                        # raw .reshape (no permute)
    tokens = jnp.transpose(x_nchw.reshape(Bs, Ds, HW), (0, 2, 1))     # (B, HW, D)

    img_tile = Bs if Bs <= 16 else 16       # cap so the batch grid stays >= 2 on v7x (2 TCs)
    b_pad = _round_up(Bs, img_tile)
    toks = jnp.pad(tokens.astype(jnp.bfloat16),
                   ((0, b_pad - Bs), (0, SP_PAD - HW), (0, 0)))       # (b_pad, 56, D) bf16

    # int32 labels as an (b_pad, 1) block (replaces the f32 one-hot DMA)
    lbl = jnp.pad(labels.astype(jnp.int32), (0, b_pad - Bs)).reshape(b_pad, 1)

    # Split / fold projection weights once at trace time:
    #   * mean-token row gets a fused (D, 3D) scaled-Q | K | V weight
    #   * spatial rows get a (D, 2D) K | V weight (no wasted Q MXU columns)
    #   * 1/sqrt(HEAD_DIM) folded into the Q weight/bias
    scaling = 1.0 / float(HEAD_DIM) ** 0.5
    wqkv = params["wqkv"]
    bqkv = params["bqkv"]
    wqkv0 = jnp.concatenate([wqkv[:, :D] * scaling, wqkv[:, D:]], axis=1).astype(jnp.bfloat16)
    bqkv0 = jnp.concatenate([bqkv[:, :D] * scaling, bqkv[:, D:]], axis=1)     # f32
    wkv = wqkv[:, D:].astype(jnp.bfloat16)                                    # (D, 2D)
    bkv = bqkv[:, D:]                                                         # (1, 2D) f32

    pos = params["pos"]
    pos0 = pos[:1]                                                  # (1, D)  mean-token pos (f32)
    pos_sp = jnp.pad(pos[1:], ((0, SP_PAD - HW), (0, 0)))           # (56, D) spatial pos (f32)

    # constant 0/1 head-selection matrix: sel[d, h] = 1 iff lane d belongs to head h
    head_of_lane = np.arange(D) // HEAD_DIM
    sel_np = (head_of_lane[:, None] == np.arange(HEADS_PAD)[None, :]).astype(np.float32)
    sel = jnp.asarray(sel_np, dtype=jnp.bfloat16)                   # (D, HEADS_PAD)
    sel_t = jnp.asarray(sel_np.T, dtype=jnp.bfloat16)               # (HEADS_PAD, D)

    wc = params["wc"].astype(jnp.bfloat16)
    wcls_pad = jnp.pad(params["wcls_t"],
                       ((0, 0), (0, C_PAD - NUM_CLASSES))).astype(jnp.bfloat16)

    grid_spec = pltpu.PrefetchScalarGridSpec(
        num_scalar_prefetch=0,
        grid=(b_pad // img_tile,),
        in_specs=[
            pl.BlockSpec((img_tile, SP_PAD, D), lambda i: (i, 0, 0)),   # bf16 spatial tokens
            pl.BlockSpec((img_tile, 1), lambda i: (i, 0)),              # int32 labels
            pl.BlockSpec((1, D), lambda i: (0, 0)),                     # pos[0]
            pl.BlockSpec((SP_PAD, D), lambda i: (0, 0)),                # pos[1:] (padded)
            pl.BlockSpec((D, 3 * D), lambda i: (0, 0)),                 # scaled-Q|K|V (resident)
            pl.BlockSpec((1, 3 * D), lambda i: (0, 0)),                 # its bias (f32)
            pl.BlockSpec((D, 2 * D), lambda i: (0, 0)),                 # K|V weight (resident)
            pl.BlockSpec((1, 2 * D), lambda i: (0, 0)),                 # K|V bias (f32)
            pl.BlockSpec((D, HEADS_PAD), lambda i: (0, 0)),             # head selection
            pl.BlockSpec((HEADS_PAD, D), lambda i: (0, 0)),             # head selection^T
            pl.BlockSpec((D, D_OUT), lambda i: (0, 0)),                 # c_proj weight
            pl.BlockSpec((1, D_OUT), lambda i: (0, 0)),                 # c_proj bias (f32)
            pl.BlockSpec((D_OUT, C_PAD), lambda i: (0, 0)),             # cls weight^T (padded)
            pl.BlockSpec(memory_space=pltpu.MemorySpace.SMEM),          # logit_scale scalar
        ],
        out_specs=pl.BlockSpec((img_tile, C_PAD), lambda i: (i, 0)),
    )

    out = pl.pallas_call(
        _attnpool_cls_kernel,
        grid_spec=grid_spec,
        out_shape=jax.ShapeDtypeStruct((b_pad, C_PAD), jnp.float32),
        compiler_params=pltpu.CompilerParams(
            dimension_semantics=("parallel",),
            # explicit VMEM budget; raise toward ~56-60 MiB (v7x) / ~100 MiB (v6e) at D=2048
            vmem_limit_bytes=48 * 1024 * 1024),
    )(toks, lbl, pos0, pos_sp, wqkv0, bqkv0, wkv, bkv,
      sel, sel_t, wc, params["bc"], wcls_pad, params["logit_scale"])

    logits_per_image = out[:Bs, :NUM_CLASSES]        # (B, C)
    logits_per_text = logits_per_image.T             # (C, B)
    loss = jnp.mean(out[:Bs, NUM_CLASSES])           # CrossEntropyLoss mean reduction
    return logits_per_image, logits_per_text, loss


def reference(feats, labels, p):
    """Pure-JAX f32 reference mirroring the PyTorch forward (eval branch)."""
    Bs = feats.shape[0]
    x_nchw = feats.reshape(Bs, D, W_SP, H_SP)
    toks = jnp.transpose(x_nchw.reshape(Bs, D, HW), (0, 2, 1))         # (B, HW, D)
    mean = jnp.mean(toks, axis=1, keepdims=True)
    t = jnp.concatenate([mean, toks], axis=1) + p["pos"][None]         # (B, TOKENS, D)
    wq, wk, wv = p["wqkv"][:, :D], p["wqkv"][:, D:2 * D], p["wqkv"][:, 2 * D:]
    bq, bk, bv = p["bqkv"][:, :D], p["bqkv"][:, D:2 * D], p["bqkv"][:, 2 * D:]
    q = t[:, :1] @ wq + bq
    k = t @ wk + bk
    v = t @ wv + bv
    qh = q.reshape(Bs, 1, NUM_HEADS, HEAD_DIM).transpose(0, 2, 1, 3)
    kh = k.reshape(Bs, TOKENS, NUM_HEADS, HEAD_DIM).transpose(0, 2, 1, 3)
    vh = v.reshape(Bs, TOKENS, NUM_HEADS, HEAD_DIM).transpose(0, 2, 1, 3)
    s = jnp.einsum("bhqd,bhkd->bhqk", qh * (1.0 / float(HEAD_DIM) ** 0.5), kh)
    a = jax.nn.softmax(s, axis=-1)
    o = jnp.einsum("bhqk,bhkd->bhqd", a, vh).transpose(0, 2, 1, 3).reshape(Bs, 1, D)
    pooled = (o @ p["wc"] + p["bc"])[:, 0]
    feat = pooled / jnp.linalg.norm(pooled, axis=-1, keepdims=True)
    logits = p["logit_scale"][0, 0] * feat @ p["wcls_t"]
    logz = jax.nn.logsumexp(logits, axis=-1)
    nll = logz - jnp.take_along_axis(logits, labels[:, None].astype(jnp.int32), axis=1)[:, 0]
    return logits, logits.T, jnp.mean(nll)


def init_params(key):
    ks = jax.random.split(key, 8)
    p = {
        # AttentionPool2d params (CLIP-style init, synthetic / deterministic)
        "pos": (jax.random.normal(ks[0], (TOKENS, D), jnp.float32) / D ** 0.5),
        # fused QKV weight/bias: columns [0,D)=Wq, [D,2D)=Wk, [2D,3D)=Wv
        "wqkv": jax.random.normal(ks[1], (D, 3 * D), jnp.float32) * 0.02,
        "bqkv": jax.random.normal(ks[2], (1, 3 * D), jnp.float32) * 0.01,
        "wc": jax.random.normal(ks[3], (D, D_OUT), jnp.float32) * 0.02,
        "bc": jax.random.normal(ks[4], (1, D_OUT), jnp.float32) * 0.01,
        # cls_score: Linear(D_OUT, NUM_CLASSES, bias=False); stored already transposed
        "wcls_t": jax.random.normal(ks[5], (D_OUT, NUM_CLASSES), jnp.float32) * 0.02,
        # logit_scale = log(1/0.07); eval branch uses it WITHOUT .exp()
        "logit_scale": jnp.full((1, 1), np.log(1.0 / 0.07), jnp.float32),
    }
    return p


if __name__ == "__main__":
    key = jax.random.PRNGKey(0)
    kp, kx, kl = jax.random.split(key, 3)
    params = init_params(kp)
    feats = jax.random.normal(kx, (B, HW, D), jnp.float32)       # stand-in encoder output
    labels = jax.random.randint(kl, (B,), 0, NUM_CLASSES, jnp.int32)

    logits_img, logits_txt, loss = object_centric_eval(feats, labels, params)
    jax.block_until_ready((logits_img, logits_txt, loss))

    ref_img, ref_txt, ref_loss = reference(feats, labels, params)
    # bf16 MXU operands (f32 accumulation) -> compare at bf16-appropriate tolerance
    np.testing.assert_allclose(np.asarray(logits_img), np.asarray(ref_img), rtol=1e-2, atol=1e-2)
    np.testing.assert_allclose(np.asarray(logits_txt), np.asarray(ref_txt), rtol=1e-2, atol=1e-2)
    np.testing.assert_allclose(np.asarray(loss), np.asarray(ref_loss), rtol=1e-2, atol=1e-2)

    print("KERNEL_OK")
</pallas_src>

<mosaic_0001>
module attributes {stable_mosaic.version = 11 : i64} {
  func.func @_attnpool_cls_kernel(%arg0: i32, %arg1: memref<2x56x128xbf16, #tpu.memory_space<vmem>>, %arg2: memref<2x1xi32, #tpu.memory_space<vmem>>, %arg3: memref<1x128xf32, #tpu.memory_space<vmem>>, %arg4: memref<56x128xf32, #tpu.memory_space<vmem>>, %arg5: memref<128x384xbf16, #tpu.memory_space<vmem>>, %arg6: memref<1x384xf32, #tpu.memory_space<vmem>>, %arg7: memref<128x256xbf16, #tpu.memory_space<vmem>>, %arg8: memref<1x256xf32, #tpu.memory_space<vmem>>, %arg9: memref<128x128xbf16, #tpu.memory_space<vmem>>, %arg10: memref<128x128xbf16, #tpu.memory_space<vmem>>, %arg11: memref<128x64xbf16, #tpu.memory_space<vmem>>, %arg12: memref<1x64xf32, #tpu.memory_space<vmem>>, %arg13: memref<64x128xbf16, #tpu.memory_space<vmem>>, %arg14: memref<1x1xf32, #tpu.memory_space<smem>>, %arg15: memref<2x128xf32, #tpu.memory_space<vmem>>) attributes {dimension_semantics = [#tpu.dimension_semantics<parallel>], iteration_bounds = array<i64: 1>, scalar_prefetch = 0 : i64, scratch_operands = 0 : i64, tpu.core_type = #tpu.core_type<tc>, window_params = [{transform_indices = @transform_0, window_bounds = array<i64: 2, 56, 128>}, {transform_indices = @transform_1, window_bounds = array<i64: 2, 1>}, {pipeline_mode = #tpu.pipeline_mode<synchronous>, transform_indices = @transform_2, window_bounds = array<i64: 1, 128>}, {pipeline_mode = #tpu.pipeline_mode<synchronous>, transform_indices = @transform_3, window_bounds = array<i64: 56, 128>}, {pipeline_mode = #tpu.pipeline_mode<synchronous>, transform_indices = @transform_4, window_bounds = array<i64: 128, 384>}, {pipeline_mode = #tpu.pipeline_mode<synchronous>, transform_indices = @transform_5, window_bounds = array<i64: 1, 384>}, {pipeline_mode = #tpu.pipeline_mode<synchronous>, transform_indices = @transform_6, window_bounds = array<i64: 128, 256>}, {pipeline_mode = #tpu.pipeline_mode<synchronous>, transform_indices = @transform_7, window_bounds = array<i64: 1, 256>}, {pipeline_mode = #tpu.pipeline_mode<synchronous>, transform_indices = @transform_8, window_bounds = array<i64: 128, 128>}, {pipeline_mode = #tpu.pipeline_mode<synchronous>, transform_indices = @transform_9, window_bounds = array<i64: 128, 128>}, {pipeline_mode = #tpu.pipeline_mode<synchronous>, transform_indices = @transform_10, window_bounds = array<i64: 128, 64>}, {pipeline_mode = #tpu.pipeline_mode<synchronous>, transform_indices = @transform_11, window_bounds = array<i64: 1, 64>}, {pipeline_mode = #tpu.pipeline_mode<synchronous>, transform_indices = @transform_12, window_bounds = array<i64: 64, 128>}, {transform_indices = @transform_13, window_bounds = array<i64: 1, 1>}, {transform_indices = @transform_14, window_bounds = array<i64: 2, 128>}]} {
    %c0 = arith.constant 0 : index
    %c0_0 = arith.constant 0 : index
    %c0_1 = arith.constant 0 : index
    %0 = vector.load %arg1[%c0, %c0_0, %c0_1] : memref<2x56x128xbf16, #tpu.memory_space<vmem>>, vector<2x56x128xbf16>
    %1 = arith.extf %0 : vector<2x56x128xbf16> to vector<2x56x128xf32>
    %cst = arith.constant dense<0.000000e+00> : vector<2x128xf32>
    %2 = vector.multi_reduction <add>, %1, %cst [1] : vector<2x56x128xf32> to vector<2x128xf32>
    %cst_2 = arith.constant 0.0204081628 : f32
    %3 = vector.broadcast %cst_2 : f32 to vector<2x128xf32>
    %4 = arith.mulf %2, %3 : vector<2x128xf32>
    %c0_3 = arith.constant 0 : index
    %c0_4 = arith.constant 0 : index
    %5 = vector.load %arg3[%c0_3, %c0_4] : memref<1x128xf32, #tpu.memory_space<vmem>>, vector<1x128xf32>
    %6 = vector.broadcast %5 : vector<1x128xf32> to vector<2x128xf32>
    %7 = arith.addf %4, %6 : vector<2x128xf32>
    %c0_5 = arith.constant 0 : index
    %c0_6 = arith.constant 0 : index
    %8 = vector.load %arg4[%c0_5, %c0_6] : memref<56x128xf32, #tpu.memory_space<vmem>>, vector<56x128xf32>
    %9 = vector.shape_cast %8 : vector<56x128xf32> to vector<1x56x128xf32>
    %10 = vector.broadcast %9 : vector<1x56x128xf32> to vector<2x56x128xf32>
    %11 = arith.addf %1, %10 : vector<2x56x128xf32>
    %12 = arith.truncf %7 : vector<2x128xf32> to vector<2x128xbf16>
    %c0_7 = arith.constant 0 : index
    %c0_8 = arith.constant 0 : index
    %13 = vector.load %arg5[%c0_7, %c0_8] : memref<128x384xbf16, #tpu.memory_space<vmem>>, vector<128x384xbf16>
    %cst_9 = arith.constant dense<0.000000e+00> : vector<2x384xf32>
    %14 = tpu.matmul %12, %13, %cst_9 {dimension_numbers = #tpu.dot_dimension_numbers<[1], [0], [0], [1], [0, 0, 1, 1], [], []>} : vector<2x128xbf16>, vector<128x384xbf16>, vector<2x384xf32> -> vector<2x384xf32>
    %c0_10 = arith.constant 0 : index
    %c0_11 = arith.constant 0 : index
    %15 = vector.load %arg6[%c0_10, %c0_11] : memref<1x384xf32, #tpu.memory_space<vmem>>, vector<1x384xf32>
    %16 = vector.broadcast %15 : vector<1x384xf32> to vector<2x384xf32>
    %17 = arith.addf %14, %16 : vector<2x384xf32>
    %18 = vector.extract_strided_slice %17 {offsets = [0, 0], sizes = [2, 128], strides = [1, 1]} : vector<2x384xf32> to vector<2x128xf32>
    %19 = vector.extract_strided_slice %17 {offsets = [0, 128], sizes = [2, 128], strides = [1, 1]} : vector<2x384xf32> to vector<2x128xf32>
    %20 = vector.extract_strided_slice %17 {offsets = [0, 256], sizes = [2, 128], strides = [1, 1]} : vector<2x384xf32> to vector<2x128xf32>
    %21 = vector.shape_cast %11 : vector<2x56x128xf32> to vector<112x128xf32>
    %22 = arith.truncf %21 : vector<112x128xf32> to vector<112x128xbf16>
    %c0_12 = arith.constant 0 : index
    %c0_13 = arith.constant 0 : index
    %23 = vector.load %arg7[%c0_12, %c0_13] : memref<128x256xbf16, #tpu.memory_space<vmem>>, vector<128x256xbf16>
    %cst_14 = arith.constant dense<0.000000e+00> : vector<112x256xf32>
    %24 = tpu.matmul %22, %23, %cst_14 {dimension_numbers = #tpu.dot_dimension_numbers<[1], [0], [0], [1], [0, 0, 1, 1], [], []>} : vector<112x128xbf16>, vector<128x256xbf16>, vector<112x256xf32> -> vector<112x256xf32>
    %c0_15 = arith.constant 0 : index
    %c0_16 = arith.constant 0 : index
    %25 = vector.load %arg8[%c0_15, %c0_16] : memref<1x256xf32, #tpu.memory_space<vmem>>, vector<1x256xf32>
    %26 = vector.broadcast %25 : vector<1x256xf32> to vector<112x256xf32>
    %27 = arith.addf %24, %26 : vector<112x256xf32>
    %28 = vector.extract_strided_slice %27 {offsets = [0, 0], sizes = [112, 128], strides = [1, 1]} : vector<112x256xf32> to vector<112x128xf32>
    %29 = vector.shape_cast %28 : vector<112x128xf32> to vector<2x56x128xf32>
    %30 = vector.extract_strided_slice %27 {offsets = [0, 128], sizes = [112, 128], strides = [1, 1]} : vector<112x256xf32> to vector<112x128xf32>
    %31 = vector.shape_cast %30 : vector<112x128xf32> to vector<2x56x128xf32>
    %32 = arith.mulf %18, %19 : vector<2x128xf32>
    %33 = arith.truncf %32 : vector<2x128xf32> to vector<2x128xbf16>
    %c0_17 = arith.constant 0 : index
    %c0_18 = arith.constant 0 : index
    %34 = vector.load %arg9[%c0_17, %c0_18] : memref<128x128xbf16, #tpu.memory_space<vmem>>, vector<128x128xbf16>
    %cst_19 = arith.constant dense<0.000000e+00> : vector<2x128xf32>
    %35 = tpu.matmul %33, %34, %cst_19 {dimension_numbers = #tpu.dot_dimension_numbers<[1], [0], [0], [1], [0, 0, 1, 1], [], []>} : vector<2x128xbf16>, vector<128x128xbf16>, vector<2x128xf32> -> vector<2x128xf32>
    %36 = vector.shape_cast %18 : vector<2x128xf32> to vector<2x1x128xf32>
    %37 = vector.broadcast %36 : vector<2x1x128xf32> to vector<2x56x128xf32>
    %38 = arith.mulf %37, %29 : vector<2x56x128xf32>
    %39 = vector.shape_cast %38 : vector<2x56x128xf32> to vector<112x128xf32>
    %40 = arith.truncf %39 : vector<112x128xf32> to vector<112x128xbf16>
    %c0_20 = arith.constant 0 : index
    %c0_21 = arith.constant 0 : index
    %41 = vector.load %arg9[%c0_20, %c0_21] : memref<128x128xbf16, #tpu.memory_space<vmem>>, vector<128x128xbf16>
    %cst_22 = arith.constant dense<0.000000e+00> : vector<112x128xf32>
    %42 = tpu.matmul %40, %41, %cst_22 {dimension_numbers = #tpu.dot_dimension_numbers<[1], [0], [0], [1], [0, 0, 1, 1], [], []>} : vector<112x128xbf16>, vector<128x128xbf16>, vector<112x128xf32> -> vector<112x128xf32>
    %43 = vector.shape_cast %42 : vector<112x128xf32> to vector<2x56x128xf32>
    %44 = tpu.iota {dimensions = array<i32: 1>} : vector<2x56x128xi32>
    %c49_i32 = arith.constant 49 : i32
    %45 = vector.broadcast %c49_i32 : i32 to vector<2x56x128xi32>
    %46 = arith.cmpi slt, %44, %45 : vector<2x56x128xi32>
    %cst_23 = arith.constant -1.000000e+30 : f32
    %47 = vector.broadcast %cst_23 : f32 to vector<2x56x128xf32>
    %48 = arith.select %46, %43, %47 : vector<2x56x128xi1>, vector<2x56x128xf32>
    %cst_24 = arith.constant dense<0xFF800000> : vector<2x128xf32>
    %49 = vector.multi_reduction <maximumf>, %48, %cst_24 [1] : vector<2x56x128xf32> to vector<2x128xf32>
    %50 = arith.maximumf %49, %35 : vector<2x128xf32>
    %51 = arith.subf %35, %50 : vector<2x128xf32>
    %52 = math.exp %51 : vector<2x128xf32>
    %53 = vector.shape_cast %50 : vector<2x128xf32> to vector<2x1x128xf32>
    %54 = vector.broadcast %53 : vector<2x1x128xf32> to vector<2x56x128xf32>
    %55 = arith.subf %48, %54 : vector<2x56x128xf32>
    %56 = math.exp %55 : vector<2x56x128xf32>
    %cst_25 = arith.constant dense<0.000000e+00> : vector<2x128xf32>
    %57 = vector.multi_reduction <add>, %56, %cst_25 [1] : vector<2x56x128xf32> to vector<2x128xf32>
    %58 = arith.addf %52, %57 : vector<2x128xf32>
    %59 = arith.truncf %52 : vector<2x128xf32> to vector<2x128xbf16>
    %c0_26 = arith.constant 0 : index
    %c0_27 = arith.constant 0 : index
    %60 = vector.load %arg10[%c0_26, %c0_27] : memref<128x128xbf16, #tpu.memory_space<vmem>>, vector<128x128xbf16>
    %cst_28 = arith.constant dense<0.000000e+00> : vector<2x128xf32>
    %61 = tpu.matmul %59, %60, %cst_28 {dimension_numbers = #tpu.dot_dimension_numbers<[1], [0], [0], [1], [0, 0, 1, 1], [], []>} : vector<2x128xbf16>, vector<128x128xbf16>, vector<2x128xf32> -> vector<2x128xf32>
    %62 = vector.shape_cast %56 : vector<2x56x128xf32> to vector<112x128xf32>
    %63 = arith.truncf %62 : vector<112x128xf32> to vector<112x128xbf16>
    %c0_29 = arith.constant 0 : index
    %c0_30 = arith.constant 0 : index
    %64 = vector.load %arg10[%c0_29, %c0_30] : memref<128x128xbf16, #tpu.memory_space<vmem>>, vector<128x128xbf16>
    %cst_31 = arith.constant dense<0.000000e+00> : vector<112x128xf32>
    %65 = tpu.matmul %63, %64, %cst_31 {dimension_numbers = #tpu.dot_dimension_numbers<[1], [0], [0], [1], [0, 0, 1, 1], [], []>} : vector<112x128xbf16>, vector<128x128xbf16>, vector<112x128xf32> -> vector<112x128xf32>
    %66 = vector.shape_cast %65 : vector<112x128xf32> to vector<2x56x128xf32>
    %67 = arith.mulf %61, %20 : vector<2x128xf32>
    %68 = arith.mulf %66, %31 : vector<2x56x128xf32>
    %cst_32 = arith.constant dense<0.000000e+00> : vector<2x128xf32>
    %69 = vector.multi_reduction <add>, %68, %cst_32 [1] : vector<2x56x128xf32> to vector<2x128xf32>
    %70 = arith.addf %67, %69 : vector<2x128xf32>
    %71 = tpu.reciprocal %58 {approx = true} : vector<2x128xf32> -> vector<2x128xf32>
    %72 = arith.truncf %71 : vector<2x128xf32> to vector<2x128xbf16>
    %c0_33 = arith.constant 0 : index
    %c0_34 = arith.constant 0 : index
    %73 = vector.load %arg10[%c0_33, %c0_34] : memref<128x128xbf16, #tpu.memory_space<vmem>>, vector<128x128xbf16>
    %cst_35 = arith.constant dense<0.000000e+00> : vector<2x128xf32>
    %74 = tpu.matmul %72, %73, %cst_35 {dimension_numbers = #tpu.dot_dimension_numbers<[1], [0], [0], [1], [0, 0, 1, 1], [], []>} : vector<2x128xbf16>, vector<128x128xbf16>, vector<2x128xf32> -> vector<2x128xf32>
    %75 = arith.mulf %70, %74 : vector<2x128xf32>
    %76 = arith.truncf %75 : vector<2x128xf32> to vector<2x128xbf16>
    %c0_36 = arith.constant 0 : index
    %c0_37 = arith.constant 0 : index
    %77 = vector.load %arg11[%c0_36, %c0_37] : memref<128x64xbf16, #tpu.memory_space<vmem>>, vector<128x64xbf16>
    %cst_38 = arith.constant dense<0.000000e+00> : vector<2x64xf32>
    %78 = tpu.matmul %76, %77, %cst_38 {dimension_numbers = #tpu.dot_dimension_numbers<[1], [0], [0], [1], [0, 0, 1, 1], [], []>} : vector<2x128xbf16>, vector<128x64xbf16>, vector<2x64xf32> -> vector<2x64xf32>
    %c0_39 = arith.constant 0 : index
    %c0_40 = arith.constant 0 : index
    %79 = vector.load %arg12[%c0_39, %c0_40] : memref<1x64xf32, #tpu.memory_space<vmem>>, vector<1x64xf32>
    %80 = vector.broadcast %79 : vector<1x64xf32> to vector<2x64xf32>
    %81 = arith.addf %78, %80 : vector<2x64xf32>
    %82 = arith.mulf %81, %81 : vector<2x64xf32>
    %cst_41 = arith.constant dense<0.000000e+00> : vector<2xf32>
    %83 = vector.multi_reduction <add>, %82, %cst_41 [1] : vector<2x64xf32> to vector<2xf32>
    %84 = vector.shape_cast %83 : vector<2xf32> to vector<2x1xf32>
    %85 = math.rsqrt %84 : vector<2x1xf32>
    %86 = vector.broadcast %85 : vector<2x1xf32> to vector<2x64xf32>
    %87 = arith.mulf %81, %86 : vector<2x64xf32>
    %c0_42 = arith.constant 0 : index
    %c0_43 = arith.constant 0 : index
    %88 = memref.load %arg14[%c0_42, %c0_43] : memref<1x1xf32, #tpu.memory_space<smem>>
    %89 = arith.truncf %87 : vector<2x64xf32> to vector<2x64xbf16>
    %c0_44 = arith.constant 0 : index
    %c0_45 = arith.constant 0 : index
    %90 = vector.load %arg13[%c0_44, %c0_45] : memref<64x128xbf16, #tpu.memory_space<vmem>>, vector<64x128xbf16>
    %cst_46 = arith.constant dense<0.000000e+00> : vector<2x128xf32>
    %91 = tpu.matmul %89, %90, %cst_46 {dimension_numbers = #tpu.dot_dimension_numbers<[1], [0], [0], [1], [0, 0, 1, 1], [], []>} : vector<2x64xbf16>, vector<64x128xbf16>, vector<2x128xf32> -> vector<2x128xf32>
    %92 = vector.broadcast %88 : f32 to vector<2x128xf32>
    %93 = arith.mulf %92, %91 : vector<2x128xf32>
    %94 = tpu.iota {dimensions = array<i32: 1>} : vector<2x128xi32>
    %c10_i32 = arith.constant 10 : i32
    %95 = vector.broadcast %c10_i32 : i32 to vector<2x128xi32>
    %96 = arith.cmpi slt, %94, %95 : vector<2x128xi32>
    %cst_47 = arith.constant -1.000000e+30 : f32
    %97 = vector.broadcast %cst_47 : f32 to vector<2x128xf32>
    %98 = arith.select %96, %93, %97 : vector<2x128xi1>, vector<2x128xf32>
    %cst_48 = arith.constant dense<0xFF800000> : vector<2xf32>
    %99 = vector.multi_reduction <maximumf>, %98, %cst_48 [1] : vector<2x128xf32> to vector<2xf32>
    %100 = vector.shape_cast %99 : vector<2xf32> to vector<2x1xf32>
    %101 = vector.broadcast %100 : vector<2x1xf32> to vector<2x128xf32>
    %102 = arith.subf %98, %101 : vector<2x128xf32>
    %103 = math.exp %102 : vector<2x128xf32>
    %cst_49 = arith.constant dense<0.000000e+00> : vector<2xf32>
    %104 = vector.multi_reduction <add>, %103, %cst_49 [1] : vector<2x128xf32> to vector<2xf32>
    %105 = vector.shape_cast %104 : vector<2xf32> to vector<2x1xf32>
    %106 = math.log %105 : vector<2x1xf32>
    %107 = arith.addf %100, %106 : vector<2x1xf32>
    %c0_50 = arith.constant 0 : index
    %c0_51 = arith.constant 0 : index
    %108 = vector.load %arg2[%c0_50, %c0_51] : memref<2x1xi32, #tpu.memory_space<vmem>>, vector<2x1xi32>
    %109 = vector.broadcast %108 : vector<2x1xi32> to vector<2x128xi32>
    %110 = arith.cmpi eq, %94, %109 : vector<2x128xi32>
    %cst_52 = arith.constant 0.000000e+00 : f32
    %111 = vector.broadcast %cst_52 : f32 to vector<2x128xf32>
    %112 = arith.select %110, %93, %111 : vector<2x128xi1>, vector<2x128xf32>
    %cst_53 = arith.constant dense<0.000000e+00> : vector<2xf32>
    %113 = vector.multi_reduction <add>, %112, %cst_53 [1] : vector<2x128xf32> to vector<2xf32>
    %114 = vector.shape_cast %113 : vector<2xf32> to vector<2x1xf32>
    %115 = arith.subf %107, %114 : vector<2x1xf32>
    %c10_i32_54 = arith.constant 10 : i32
    %116 = vector.broadcast %c10_i32_54 : i32 to vector<2x128xi32>
    %117 = arith.cmpi eq, %94, %116 : vector<2x128xi32>
    %118 = vector.shape_cast %115 : vector<2x1xf32> to vector<2x1xf32>
    %119 = vector.broadcast %118 : vector<2x1xf32> to vector<2x128xf32>
    %120 = arith.select %117, %119, %93 : vector<2x128xi1>, vector<2x128xf32>
    %c0_55 = arith.constant 0 : index
    %c0_56 = arith.constant 0 : index
    %121 = vector.load %arg15[%c0_55, %c0_56] : memref<2x128xf32, #tpu.memory_space<vmem>>, vector<2x128xf32>
    tpu.vector_store %arg15[%c0_55, %c0_56], %120 {strides = array<i32>} : memref<2x128xf32, #tpu.memory_space<vmem>>, vector<2x128xf32>,
    return
  }
  func.func @transform_0(%arg0: i32) -> (i32, i32, i32) {
    %c0_i32 = arith.constant 0 : i32
    %c0_i32_0 = arith.constant 0 : i32
    %c0_i32_1 = arith.constant 0 : i32
    return %arg0, %c0_i32, %c0_i32_0 : i32, i32, i32
  }
  func.func @transform_1(%arg0: i32) -> (i32, i32) {
    %c0_i32 = arith.constant 0 : i32
    %c0_i32_0 = arith.constant 0 : i32
    return %arg0, %c0_i32 : i32, i32
  }
  func.func @transform_2(%arg0: i32) -> (i32, i32) {
    %c0_i32 = arith.constant 0 : i32
    %c0_i32_0 = arith.constant 0 : i32
    %c0_i32_1 = arith.constant 0 : i32
    return %c0_i32, %c0_i32_0 : i32, i32
  }
  func.func @transform_3(%arg0: i32) -> (i32, i32) {
    %c0_i32 = arith.constant 0 : i32
    %c0_i32_0 = arith.constant 0 : i32
    %c0_i32_1 = arith.constant 0 : i32
    return %c0_i32, %c0_i32_0 : i32, i32
  }
  func.func @transform_4(%arg0: i32) -> (i32, i32) {
    %c0_i32 = arith.constant 0 : i32
    %c0_i32_0 = arith.constant 0 : i32
    %c0_i32_1 = arith.constant 0 : i32
    return %c0_i32, %c0_i32_0 : i32, i32
  }
  func.func @transform_5(%arg0: i32) -> (i32, i32) {
    %c0_i32 = arith.constant 0 : i32
    %c0_i32_0 = arith.constant 0 : i32
    %c0_i32_1 = arith.constant 0 : i32
    return %c0_i32, %c0_i32_0 : i32, i32
  }
  func.func @transform_6(%arg0: i32) -> (i32, i32) {
    %c0_i32 = arith.constant 0 : i32
    %c0_i32_0 = arith.constant 0 : i32
    %c0_i32_1 = arith.constant 0 : i32
    return %c0_i32, %c0_i32_0 : i32, i32
  }
  func.func @transform_7(%arg0: i32) -> (i32, i32) {
    %c0_i32 = arith.constant 0 : i32
    %c0_i32_0 = arith.constant 0 : i32
    %c0_i32_1 = arith.constant 0 : i32
    return %c0_i32, %c0_i32_0 : i32, i32
  }
  func.func @transform_8(%arg0: i32) -> (i32, i32) {
    %c0_i32 = arith.constant 0 : i32
    %c0_i32_0 = arith.constant 0 : i32
    %c0_i32_1 = arith.constant 0 : i32
    return %c0_i32, %c0_i32_0 : i32, i32
  }
  func.func @transform_9(%arg0: i32) -> (i32, i32) {
    %c0_i32 = arith.constant 0 : i32
    %c0_i32_0 = arith.constant 0 : i32
    %c0_i32_1 = arith.constant 0 : i32
    return %c0_i32, %c0_i32_0 : i32, i32
  }
  func.func @transform_10(%arg0: i32) -> (i32, i32) {
    %c0_i32 = arith.constant 0 : i32
    %c0_i32_0 = arith.constant 0 : i32
    %c0_i32_1 = arith.constant 0 : i32
    return %c0_i32, %c0_i32_0 : i32, i32
  }
  func.func @transform_11(%arg0: i32) -> (i32, i32) {
    %c0_i32 = arith.constant 0 : i32
    %c0_i32_0 = arith.constant 0 : i32
    %c0_i32_1 = arith.constant 0 : i32
    return %c0_i32, %c0_i32_0 : i32, i32
  }
  func.func @transform_12(%arg0: i32) -> (i32, i32) {
    %c0_i32 = arith.constant 0 : i32
    %c0_i32_0 = arith.constant 0 : i32
    %c0_i32_1 = arith.constant 0 : i32
    return %c0_i32, %c0_i32_0 : i32, i32
  }
  func.func @transform_13(%arg0: i32) -> (i32, i32) {
    %c0_i32 = arith.constant 0 : i32
    %c0_i32_0 = arith.constant 0 : i32
    %c0_i32_1 = arith.constant 0 : i32
    return %c0_i32, %c0_i32_0 : i32, i32
  }
  func.func @transform_14(%arg0: i32) -> (i32, i32) {
    %c0_i32 = arith.constant 0 : i32
    %c0_i32_0 = arith.constant 0 : i32
    return %arg0, %c0_i32 : i32, i32
  }
}

</mosaic_0001>

<llo_original>
// kernel: object_centric_eval.1
$region0: #{object_centric_eval.1}
  #allocation0 [shape = 'u32[]', space=smem, size = 0x4, offset = 0x4, fixed_abs, tag = 'smem constant byte address 0x4 - core index']
  #allocation1 [shape = 'u32[144,128]{1,0:T(1,128)}', space=vmem, size = 0x12000, scoped, tag = 'internal scratch']
  #allocation2 [shape = 'f32[1,1]{1,0:T(1,128)S(6)}', space=smem, size = 0x200, scoped, tag = 'scoped memory for object_centric_eval.1']
  %s0 = inlined_call_operand.vmem [shape: bf16[2,56,128], index: 0, kind: input, shape index: {}]
  %s1 = inlined_call_operand.vmem [shape: s32[2,1], index: 1, kind: input, shape index: {}]
  %s2 = inlined_call_operand.vmem [shape: f32[1,128], index: 2, kind: input, shape index: {}]
  %s3 = inlined_call_operand.vmem [shape: f32[56,128], index: 3, kind: input, shape index: {}]
  %s4 = inlined_call_operand.vmem [shape: bf16[128,384], index: 4, kind: input, shape index: {}]
  %s5 = inlined_call_operand.vmem [shape: f32[1,384], index: 5, kind: input, shape index: {}]
  %s6 = inlined_call_operand.vmem [shape: bf16[128,256], index: 6, kind: input, shape index: {}]
  %s7 = inlined_call_operand.vmem [shape: f32[1,256], index: 7, kind: input, shape index: {}]
  %s8 = inlined_call_operand.vmem [shape: bf16[128,128], index: 8, kind: input, shape index: {}]
  %s9 = inlined_call_operand.vmem [shape: bf16[128,128], index: 9, kind: input, shape index: {}]
  %s10 = inlined_call_operand.vmem [shape: bf16[128,64], index: 10, kind: input, shape index: {}]
  %s11 = inlined_call_operand.vmem [shape: f32[1,64], index: 11, kind: input, shape index: {}]
  %s12 = inlined_call_operand.vmem [shape: bf16[64,128], index: 12, kind: input, shape index: {}]
  %s13 = inlined_call_operand.<no memory space> [shape: f32[1,1], index: 13, kind: input, shape index: {}]
  %s14 = inlined_call_operand.vmem [shape: f32[2,128], index: 14, kind: output, shape index: {}]
  %s15 = sld [smem:[#allocation0]]
  $region66: #{object_centric_eval.1} parent=0
    _
  %s17 = ssub.s32 1, %s15
  %s18 = scalar_select 0, %s17, %s15
  %19 = sst [smem:[#allocation2]] %s13
  // Predicated region
  $region2: #{object_centric_eval.1} parent=0 // pred_check
    _
  $region3: #{object_centric_eval.1} parent=0 // pred_check_branch
    %21 = sbr.rel (0) target = $region5
  $region4: #{object_centric_eval.1} parent=0 // pred_region
    _
  $region5: #{object_centric_eval.1} parent=0 // pred_fallthru
    _
  // Predicated region
  $region6: #{object_centric_eval.1} parent=0 // pred_check
    _
  $region7: #{object_centric_eval.1} parent=0 // pred_check_branch
    %23 = sbr.rel (0) target = $region9
  $region8: #{object_centric_eval.1} parent=0 // pred_region
    _
  $region9: #{object_centric_eval.1} parent=0 // pred_fallthru
    _
  // Predicated region
  $region10: #{object_centric_eval.1} parent=0 // pred_check
    _
  $region11: #{object_centric_eval.1} parent=0 // pred_check_branch
    %25 = sbr.rel (0) target = $region13
  $region12: #{object_centric_eval.1} parent=0 // pred_region
    _
  $region13: #{object_centric_eval.1} parent=0 // pred_fallthru
    _
  // Predicated region
  $region14: #{object_centric_eval.1} parent=0 // pred_check
    _
  $region15: #{object_centric_eval.1} parent=0 // pred_check_branch
    %27 = sbr.rel (0) target = $region17
  $region16: #{object_centric_eval.1} parent=0 // pred_region
    _
  $region17: #{object_centric_eval.1} parent=0 // pred_fallthru
    _
  // Predicated region
  $region18: #{object_centric_eval.1} parent=0 // pred_check
    _
  $region19: #{object_centric_eval.1} parent=0 // pred_check_branch
    %29 = sbr.rel (0) target = $region21
  $region20: #{object_centric_eval.1} parent=0 // pred_region
    _
  $region21: #{object_centric_eval.1} parent=0 // pred_fallthru
    _
  // Predicated region
  $region22: #{object_centric_eval.1} parent=0 // pred_check
    _
  $region23: #{object_centric_eval.1} parent=0 // pred_check_branch
    %31 = sbr.rel (0) target = $region25
  $region24: #{object_centric_eval.1} parent=0 // pred_region
    _
  $region25: #{object_centric_eval.1} parent=0 // pred_fallthru
    _
  // Predicated region
  $region26: #{object_centric_eval.1} parent=0 // pred_check
    _
  $region27: #{object_centric_eval.1} parent=0 // pred_check_branch
    %33 = sbr.rel (0) target = $region29
  $region28: #{object_centric_eval.1} parent=0 // pred_region
    _
  $region29: #{object_centric_eval.1} parent=0 // pred_fallthru
    _
  // Predicated region
  $region30: #{object_centric_eval.1} parent=0 // pred_check
    _
  $region31: #{object_centric_eval.1} parent=0 // pred_check_branch
    %35 = sbr.rel (0) target = $region33
  $region32: #{object_centric_eval.1} parent=0 // pred_region
    _
  $region33: #{object_centric_eval.1} parent=0 // pred_fallthru
    _
  // Predicated region
  $region34: #{object_centric_eval.1} parent=0 // pred_check
    _
  $region35: #{object_centric_eval.1} parent=0 // pred_check_branch
    %37 = sbr.rel (0) target = $region37
  $region36: #{object_centric_eval.1} parent=0 // pred_region
    _
  $region37: #{object_centric_eval.1} parent=0 // pred_fallthru
    _
  // Predicated region
  $region38: #{object_centric_eval.1} parent=0 // pred_check
    _
  $region39: #{object_centric_eval.1} parent=0 // pred_check_branch
    %39 = sbr.rel (0) target = $region41
  $region40: #{object_centric_eval.1} parent=0 // pred_region
    _
  $region41: #{object_centric_eval.1} parent=0 // pred_fallthru
    _
  // Predicated region
  $region42: #{object_centric_eval.1} parent=0 // pred_check
    _
  $region43: #{object_centric_eval.1} parent=0 // pred_check_branch
    %41 = sbr.rel (0) target = $region45
  $region44: #{object_centric_eval.1} parent=0 // pred_region
    _
  $region45: #{object_centric_eval.1} parent=0 // pred_fallthru
    _
  // Predicated region
  $region46: #{object_centric_eval.1} parent=0 // pred_check
    _
  $region47: #{object_centric_eval.1} parent=0 // pred_check_branch
    %43 = sbr.rel (0) target = $region49
  $region48: #{object_centric_eval.1} parent=0 // pred_region
    _
  $region49: #{object_centric_eval.1} parent=0 // pred_fallthru
    _
  // Predicated region
  $region50: #{object_centric_eval.1} parent=0 // pred_check
    _
  $region51: #{object_centric_eval.1} parent=0 // pred_check_branch
    %45 = sbr.rel (0) target = $region53
  $region52: #{object_centric_eval.1} parent=0 // pred_region
    _
  $region53: #{object_centric_eval.1} parent=0 // pred_fallthru
    _
  // Predicated region
  $region54: #{object_centric_eval.1} parent=0 // pred_check
    _
  $region55: #{object_centric_eval.1} parent=0 // pred_check_branch
    %47 = sbr.rel (0) target = $region57
  $region56: #{object_centric_eval.1} parent=0 // pred_region
    _
  $region57: #{object_centric_eval.1} parent=0 // pred_fallthru
    _
  %v49 = vld [vmem:[%s0] sm:$0xf]
  %v50 = vld [vmem:[%s0 + $0x4] sm:$0xf]
  %v51 = vld [vmem:[%s0 + $0x8] sm:$0xf]
  %v52 = vld [vmem:[%s0 + $0xc] sm:$0xf]
  %v53 = vld [vmem:[%s0 + $0x10] sm:$0xf]
  %v54 = vld [vmem:[%s0 + $0x14] sm:$0xf]
  %v55 = vld [vmem:[%s0 + $0x18] sm:$0xf]
  %v56 = vld [vmem:[%s0 + $0x1c] sm:$0xf]
  %v57 = vld [vmem:[%s0 + $0x20] sm:$0xf]
  %v58 = vld [vmem:[%s0 + $0x24] sm:$0xf]
  %v59 = vld [vmem:[%s0 + $0x28] sm:$0xf]
  %v60 = vld [vmem:[%s0 + $0x2c] sm:$0xf]
  %v61 = vld [vmem:[%s0 + $0x30] sm:$0xf]
  %v62 = vld [vmem:[%s0 + $0x34] sm:$0xf]
  %v63 = vunpack.c.l.bf16 %v49
  %v64 = vunpack.c.l.bf16 %v50
  %v65 = vunpack.c.l.bf16 %v51
  %v66 = vunpack.c.l.bf16 %v52
  %v67 = vunpack.c.l.bf16 %v53
  %v68 = vunpack.c.l.bf16 %v54
  %v69 = vunpack.c.l.bf16 %v55
  %v70 = vunpack.c.l.bf16 %v56
  %v71 = vunpack.c.l.bf16 %v57
  %v72 = vunpack.c.l.bf16 %v58
  %v73 = vunpack.c.l.bf16 %v59
  %v74 = vunpack.c.l.bf16 %v60
  %v75 = vunpack.c.l.bf16 %v61
  %v76 = vunpack.c.l.bf16 %v62
  %v77 = vadd.f32 %v63, %v64
  %v78 = vadd.f32 %v77, %v65
  %v79 = vadd.f32 %v78, %v66
  %v80 = vadd.f32 %v79, %v67
  %v81 = vadd.f32 %v80, %v68
  %v82 = vadd.f32 %v81, %v69
  %v83 = vrot.slane %v82, 4
  %v84 = vadd.f32 %v82, %v83
  %v85 = vrot.slane %v84, 2
  %v86 = vadd.f32 %v84, %v85
  %v87 = vrot.slane %v86, 1
  %v88 = vadd.f32 %v86, %v87
  %v89 = vadd.f32 %v70, %v71
  %v90 = vadd.f32 %v89, %v72
  %v91 = vadd.f32 %v90, %v73
  %v92 = vadd.f32 %v91, %v74
  %v93 = vadd.f32 %v92, %v75
  %v94 = vadd.f32 %v93, %v76
  %v95 = vrot.slane %v94, 4
  %v96 = vadd.f32 %v94, %v95
  %v97 = vrot.slane %v96, 2
  %v98 = vadd.f32 %v96, %v97
  %v99 = vrot.slane %v98, 1
  %v100 = vadd.f32 %v98, %v99
  %v101 = vmul.f32 %v88, 0.020408163
  %v102 = vmul.f32 %v100, 0.020408163
  %v103 = vld [vmem:[%s2] sm:$0x1]
  %v105 = vlaneseq
  %v106 = vshrl.u32 %v105, 7
  %v107 = vsub.s32 0, %v106
  %v108 = vrot.slane %v103, %v107
  %v110 = vadd.f32 %v101, %v108
  %v111 = vadd.f32 %v102, %v108
  %v112 = vld [vmem:[%s3] sm:$0xff]
  %v113 = vld [vmem:[%s3 + $0x8] sm:$0xff]
  %v114 = vld [vmem:[%s3 + $0x10] sm:$0xff]
  %v115 = vld [vmem:[%s3 + $0x18] sm:$0xff]
  %v116 = vld [vmem:[%s3 + $0x20] sm:$0xff]
  %v117 = vld [vmem:[%s3 + $0x28] sm:$0xff]
  %v118 = vld [vmem:[%s3 + $0x30] sm:$0xff]
  %v119 = vadd.f32 %v63, %v112
  %v120 = vadd.f32 %v64, %v113
  %v121 = vadd.f32 %v65, %v114
  %v122 = vadd.f32 %v66, %v115
  %v123 = vadd.f32 %v67, %v116
  %v124 = vadd.f32 %v68, %v117
  %v125 = vadd.f32 %v69, %v118
  %v126 = vadd.f32 %v70, %v112
  %v127 = vadd.f32 %v71, %v113
  %v128 = vadd.f32 %v72, %v114
  %v129 = vadd.f32 %v73, %v115
  %v130 = vadd.f32 %v74, %v116
  %v131 = vadd.f32 %v75, %v117
  %v132 = vadd.f32 %v76, %v118
  %v133 = vpack.c.bf16 %v110, %v110
  %v134 = vpack.c.bf16 %v111, %v111
  %v135 = vld [vmem:[%s4] sm:$0xff]
  %v136 = vld [vmem:[%s4 + $0x8] sm:$0xf]
  %v137 = vld [vmem:[%s4 + $0xc] sm:$0xff]
  %v138 = vld [vmem:[%s4 + $0x14] sm:$0xf]
  %v139 = vld [vmem:[%s4 + $0x18] sm:$0xff]
  %v140 = vld [vmem:[%s4 + $0x20] sm:$0xf]
  %v141 = vld [vmem:[%s4 + $0x24] sm:$0xff]
  %v142 = vld [vmem:[%s4 + $0x2c] sm:$0xf]
  %v143 = vld [vmem:[%s4 + $0x30] sm:$0xff]
  %v144 = vld [vmem:[%s4 + $0x38] sm:$0xf]
  %v145 = vld [vmem:[%s4 + $0x3c] sm:$0xff]
  %v146 = vld [vmem:[%s4 + $0x44] sm:$0xf]
  %v147 = vld [vmem:[%s4 + $0x48] sm:$0xff]
  %v148 = vld [vmem:[%s4 + $0x50] sm:$0xf]
  %v149 = vld [vmem:[%s4 + $0x54] sm:$0xff]
  %v150 = vld [vmem:[%s4 + $0x5c] sm:$0xf]
  %v151 = vld [vmem:[%s4 + $0x60] sm:$0xff]
  %v152 = vld [vmem:[%s4 + $0x68] sm:$0xf]
  %v153 = vld [vmem:[%s4 + $0x6c] sm:$0xff]
  %v154 = vld [vmem:[%s4 + $0x74] sm:$0xf]
  %v155 = vld [vmem:[%s4 + $0x78] sm:$0xff]
  %v156 = vld [vmem:[%s4 + $0x80] sm:$0xf]
  %v157 = vld [vmem:[%s4 + $0x84] sm:$0xff]
  %v158 = vld [vmem:[%s4 + $0x8c] sm:$0xf]
  %v159 = vld [vmem:[%s4 + $0x90] sm:$0xff]
  %v160 = vld [vmem:[%s4 + $0x98] sm:$0xf]
  %v161 = vld [vmem:[%s4 + $0x9c] sm:$0xff]
  %v162 = vld [vmem:[%s4 + $0xa4] sm:$0xf]
  %v163 = vld [vmem:[%s4 + $0xa8] sm:$0xff]
  %v164 = vld [vmem:[%s4 + $0xb0] sm:$0xf]
  %v165 = vld [vmem:[%s4 + $0xb4] sm:$0xff]
  %v166 = vld [vmem:[%s4 + $0xbc] sm:$0xf]
  %v167 = vld [vmem:[%s5] sm:$0x7]
  %v169 = vlaneseq
  %v170 = vshrl.u32 %v169, 7
  %v171 = vsub.s32 0, %v170
  %v172 = vrot.slane %v167, %v171
  %v173 = vlaneseq
  %v174 = vshrl.u32 %v173, 7
  %v175 = vsub.s32 1, %v174
  %v176 = vrot.slane %v167, %v175
  %v177 = vlaneseq
  %v178 = vshrl.u32 %v177, 7
  %v179 = vsub.s32 2, %v178
  %v180 = vrot.slane %v167, %v179
  %v186 = vunpack.c.l.b16 %v133
  %v187 = vunpack.c.l.b16 %v134
  %v188 = vrot.slane %v187, 7
  %vm189 = vcmask 1041409
  %v190 = vsel %vm189, %v188, %v186
  %v191 = vpack.c.b16 %v190, %v190
  %v225 = vunpack.c.l.b16 %v135
  %v226 = vunpack.c.h.b16 %v135
  %v227 = vunpack.c.l.b16 %v136
  %v228 = vunpack.c.l.b16 %v137
  %v229 = vunpack.c.h.b16 %v137
  %v230 = vunpack.c.l.b16 %v138
  %v231 = vunpack.c.l.b16 %v139
  %v232 = vunpack.c.h.b16 %v139
  %v233 = vunpack.c.l.b16 %v140
  %v234 = vunpack.c.l.b16 %v141
  %v235 = vunpack.c.h.b16 %v141
  %v236 = vunpack.c.l.b16 %v142
  %v237 = vunpack.c.l.b16 %v143
  %v238 = vunpack.c.h.b16 %v143
  %v239 = vunpack.c.l.b16 %v144
  %v240 = vunpack.c.l.b16 %v145
  %v241 = vunpack.c.h.b16 %v145
  %v242 = vunpack.c.l.b16 %v146
  %v243 = vunpack.c.l.b16 %v147
  %v244 = vunpack.c.h.b16 %v147
  %v245 = vunpack.c.l.b16 %v148
  %v246 = vunpack.c.l.b16 %v149
  %v247 = vunpack.c.h.b16 %v149
  %v248 = vunpack.c.l.b16 %v150
  %v249 = vunpack.c.l.b16 %v151
  %v250 = vunpack.c.h.b16 %v151
  %v251 = vunpack.c.l.b16 %v152
  %v252 = vunpack.c.l.b16 %v153
  %v253 = vunpack.c.h.b16 %v153
  %v254 = vunpack.c.l.b16 %v154
  %v255 = vunpack.c.l.b16 %v155
  %v256 = vunpack.c.h.b16 %v155
  %v257 = vunpack.c.l.b16 %v156
  %v258 = vunpack.c.l.b16 %v157
  %v259 = vunpack.c.h.b16 %v157
  %v260 = vunpack.c.l.b16 %v158
  %v261 = vunpack.c.l.b16 %v159
  %v262 = vunpack.c.h.b16 %v159
  %v263 = vunpack.c.l.b16 %v160
  %v264 = vunpack.c.l.b16 %v161
  %v265 = vunpack.c.h.b16 %v161
  %v266 = vunpack.c.l.b16 %v162
  %v267 = vunpack.c.l.b16 %v163
  %v268 = vunpack.c.h.b16 %v163
  %v269 = vunpack.c.l.b16 %v164
  %v270 = vunpack.c.l.b16 %v165
  %v271 = vunpack.c.h.b16 %v165
  %v272 = vunpack.c.l.b16 %v166
  %v273 = vpack.c.b16 %v228, %v225
  %v274 = vpack.c.b16 %v229, %v226
  %v275 = vpack.c.b16 %v230, %v227
  %v276 = vpack.c.b16 %v234, %v231
  %v277 = vpack.c.b16 %v235, %v232
  %v278 = vpack.c.b16 %v236, %v233
  %v279 = vpack.c.b16 %v240, %v237
  %v280 = vpack.c.b16 %v241, %v238
  %v281 = vpack.c.b16 %v242, %v239
  %v282 = vpack.c.b16 %v246, %v243
  %v283 = vpack.c.b16 %v247, %v244
  %v284 = vpack.c.b16 %v248, %v245
  %v285 = vpack.c.b16 %v252, %v249
  %v286 = vpack.c.b16 %v253, %v250
  %v287 = vpack.c.b16 %v254, %v251
  %v288 = vpack.c.b16 %v258, %v255
  %v289 = vpack.c.b16 %v259, %v256
  %v290 = vpack.c.b16 %v260, %v257
  %v291 = vpack.c.b16 %v264, %v261
  %v292 = vpack.c.b16 %v265, %v262
  %v293 = vpack.c.b16 %v266, %v263
  %v294 = vpack.c.b16 %v270, %v267
  %v295 = vpack.c.b16 %v271, %v268
  %v296 = vpack.c.b16 %v272, %v269
  %321 = vmatprep.subr.bf16.mxu0 %v295
  %322 = vmatpush1.bf16.msra.mxu0 %v294
  %323 = vmatprep.subr.bf16.mxu0 %v292
  %324 = vmatpush1.bf16.msra.mxu0 %v291
  %325 = vmatprep.subr.bf16.mxu0 %v289
  %326 = vmatpush1.bf16.msra.mxu0 %v288
  %327 = vmatprep.subr.bf16.mxu0 %v286
  %328 = vmatpush1.bf16.msra.mxu0 %v285
  %329 = vmatprep.subr.bf16.mxu0 %v283
  %330 = vmatpush1.bf16.msra.mxu0 %v282
  %331 = vmatprep.subr.bf16.mxu0 %v280
  %332 = vmatpush1.bf16.msra.mxu0 %v279
  %333 = vmatprep.subr.bf16.mxu0 %v277
  %334 = vmatpush1.bf16.msra.mxu0 %v276
  %335 = vmatprep.subr.bf16.mxu0 %v274
  %336 = vmatpush1.bf16.msra.mxu0 %v273
  %337 = vmatprep.subr.bf16.mxu0 0
  %338 = vmatpush2.bf16.msra.mxu0 0
  %339 = vmatprep.subr.bf16.mxu0 0
  %340 = vmatpush2.bf16.msra.mxu0 0
  %341 = vmatprep.subr.bf16.mxu0 0
  %342 = vmatpush2.bf16.msra.mxu0 0
  %343 = vmatprep.subr.bf16.mxu0 0
  %344 = vmatpush2.bf16.msra.mxu0 0
  %345 = vmatprep.subr.bf16.mxu0 0
  %346 = vmatpush2.bf16.msra.mxu0 0
  %347 = vmatprep.subr.bf16.mxu0 0
  %348 = vmatpush2.bf16.msra.mxu0 0
  %349 = vmatprep.subr.bf16.mxu0 0
  %350 = vmatpush2.bf16.msra.mxu0 0
  %351 = vmatprep.subr.bf16.mxu0 0
  %352 = vmatpush2.bf16.msra.mxu0 0
  %353 = vmatprep.mubr.bf16.mxu0 0
  %354 = vmatmul.mubr.bf16.gmra.mxu0 %v191
  %v355 = vpop.f32.mrf.mxu0
  %v356 = vadd.f32 %v172, %v355
  %v357 = vpop.f32.mrf.mxu0
  %v358 = vadd.f32 %v176, %v357
  %v359 = vpop.f32.mrf.mxu0
  %v360 = vpop.f32.mrf.mxu0
  %361 = vdwg.mxu0
  %362 = vmatprep.subr.bf16.mxu0 0
  %363 = vmatpush1.bf16.msra.mxu0 %v296
  %364 = vmatprep.subr.bf16.mxu0 0
  %365 = vmatpush1.bf16.msra.mxu0 %v293
  %366 = vmatprep.subr.bf16.mxu0 0
  %367 = vmatpush1.bf16.msra.mxu0 %v290
  %368 = vmatprep.subr.bf16.mxu0 0
  %369 = vmatpush1.bf16.msra.mxu0 %v287
  %370 = vmatprep.subr.bf16.mxu0 0
  %371 = vmatpush1.bf16.msra.mxu0 %v284
  %372 = vmatprep.subr.bf16.mxu0 0
  %373 = vmatpush1.bf16.msra.mxu0 %v281
  %374 = vmatprep.subr.bf16.mxu0 0
  %375 = vmatpush1.bf16.msra.mxu0 %v278
  %376 = vmatprep.subr.bf16.mxu0 0
  %377 = vmatpush1.bf16.msra.mxu0 %v275
  %378 = vmatprep.subr.bf16.mxu0 0
  %379 = vmatpush2.bf16.msra.mxu0 0
  %380 = vmatprep.subr.bf16.mxu0 0
  %381 = vmatpush2.bf16.msra.mxu0 0
  %382 = vmatprep.subr.bf16.mxu0 0
  %383 = vmatpush2.bf16.msra.mxu0 0
  %384 = vmatprep.subr.bf16.mxu0 0
  %385 = vmatpush2.bf16.msra.mxu0 0
  %386 = vmatprep.subr.bf16.mxu0 0
  %387 = vmatpush2.bf16.msra.mxu0 0
  %388 = vmatprep.subr.bf16.mxu0 0
  %389 = vmatpush2.bf16.msra.mxu0 0
  %390 = vmatprep.subr.bf16.mxu0 0
  %391 = vmatpush2.bf16.msra.mxu0 0
  %392 = vmatprep.subr.bf16.mxu0 0
  %393 = vmatpush2.bf16.msra.mxu0 0
  %394 = vmatprep.mubr.bf16.mxu0 0
  %395 = vmatmul.mubr.bf16.gmra.mxu0 %v191
  %v396 = vpop.f32.mrf.mxu0
  %v397 = vadd.f32 %v180, %v396
  %v398 = vpop.f32.mrf.mxu0
  %v399 = vpop.f32.mrf.mxu0
  %v400 = vpop.f32.mrf.mxu0
  %401 = vdwg.mxu0
  %v402 = vpack.c.bf16 %v120, %v119
  %v403 = vpack.c.bf16 %v122, %v121
  %v404 = vpack.c.bf16 %v124, %v123
  %v405 = vpack.c.bf16 %v126, %v125
  %v406 = vpack.c.bf16 %v128, %v127
  %v407 = vpack.c.bf16 %v130, %v129
  %v408 = vpack.c.bf16 %v132, %v131
  %v409 = vld [vmem:[%s6] sm:$0xff]
  %v410 = vld [vmem:[%s6 + $0x8] sm:$0xff]
  %v411 = vld [vmem:[%s6 + $0x10] sm:$0xff]
  %v412 = vld [vmem:[%s6 + $0x18] sm:$0xff]
  %v413 = vld [vmem:[%s6 + $0x20] sm:$0xff]
  %v414 = vld [vmem:[%s6 + $0x28] sm:$0xff]
  %v415 = vld [vmem:[%s6 + $0x30] sm:$0xff]
  %v416 = vld [vmem:[%s6 + $0x38] sm:$0xff]
  %v417 = vld [vmem:[%s6 + $0x40] sm:$0xff]
  %v418 = vld [vmem:[%s6 + $0x48] sm:$0xff]
  %v419 = vld [vmem:[%s6 + $0x50] sm:$0xff]
  %v420 = vld [vmem:[%s6 + $0x58] sm:$0xff]
  %v421 = vld [vmem:[%s6 + $0x60] sm:$0xff]
  %v422 = vld [vmem:[%s6 + $0x68] sm:$0xff]
  %v423 = vld [vmem:[%s6 + $0x70] sm:$0xff]
  %v424 = vld [vmem:[%s6 + $0x78] sm:$0xff]
  %v425 = vld [vmem:[%s7] sm:$0x3]
  %v427 = vlaneseq
  %v428 = vshrl.u32 %v427, 7
  %v429 = vsub.s32 0, %v428
  %v430 = vrot.slane %v425, %v429
  %v431 = vlaneseq
  %v432 = vshrl.u32 %v431, 7
  %v433 = vsub.s32 1, %v432
  %v434 = vrot.slane %v425, %v433
  %v453 = vunpack.c.l.b16 %v409
  %v454 = vunpack.c.h.b16 %v409
  %v455 = vunpack.c.l.b16 %v410
  %v456 = vunpack.c.h.b16 %v410
  %v457 = vunpack.c.l.b16 %v411
  %v458 = vunpack.c.h.b16 %v411
  %v459 = vunpack.c.l.b16 %v412
  %v460 = vunpack.c.h.b16 %v412
  %v461 = vunpack.c.l.b16 %v413
  %v462 = vunpack.c.h.b16 %v413
  %v463 = vunpack.c.l.b16 %v414
  %v464 = vunpack.c.h.b16 %v414
  %v465 = vunpack.c.l.b16 %v415
  %v466 = vunpack.c.h.b16 %v415
  %v467 = vunpack.c.l.b16 %v416
  %v468 = vunpack.c.h.b16 %v416
  %v469 = vunpack.c.l.b16 %v417
  %v470 = vunpack.c.h.b16 %v417
  %v471 = vunpack.c.l.b16 %v418
  %v472 = vunpack.c.h.b16 %v418
  %v473 = vunpack.c.l.b16 %v419
  %v474 = vunpack.c.h.b16 %v419
  %v475 = vunpack.c.l.b16 %v420
  %v476 = vunpack.c.h.b16 %v420
  %v477 = vunpack.c.l.b16 %v421
  %v478 = vunpack.c.h.b16 %v421
  %v479 = vunpack.c.l.b16 %v422
  %v480 = vunpack.c.h.b16 %v422
  %v481 = vunpack.c.l.b16 %v423
  %v482 = vunpack.c.h.b16 %v423
  %v483 = vunpack.c.l.b16 %v424
  %v484 = vunpack.c.h.b16 %v424
  %v485 = vpack.c.b16 %v455, %v453
  %v486 = vpack.c.b16 %v456, %v454
  %v487 = vpack.c.b16 %v459, %v457
  %v488 = vpack.c.b16 %v460, %v458
  %v489 = vpack.c.b16 %v463, %v461
  %v490 = vpack.c.b16 %v464, %v462
  %v491 = vpack.c.b16 %v467, %v465
  %v492 = vpack.c.b16 %v468, %v466
  %v493 = vpack.c.b16 %v471, %v469
  %v494 = vpack.c.b16 %v472, %v470
  %v495 = vpack.c.b16 %v475, %v473
  %v496 = vpack.c.b16 %v476, %v474
  %v497 = vpack.c.b16 %v479, %v477
  %v498 = vpack.c.b16 %v480, %v478
  %v499 = vpack.c.b16 %v483, %v481
  %v500 = vpack.c.b16 %v484, %v482
  %517 = vmatprep.subr.bf16.mxu0 %v500
  %518 = vmatpush1.bf16.msra.mxu0 %v499
  %519 = vmatprep.subr.bf16.mxu0 %v498
  %520 = vmatpush1.bf16.msra.mxu0 %v497
  %521 = vmatprep.subr.bf16.mxu0 %v496
  %522 = vmatpush1.bf16.msra.mxu0 %v495
  %523 = vmatprep.subr.bf16.mxu0 %v494
  %524 = vmatpush1.bf16.msra.mxu0 %v493
  %525 = vmatprep.subr.bf16.mxu0 %v492
  %526 = vmatpush1.bf16.msra.mxu0 %v491
  %527 = vmatprep.subr.bf16.mxu0 %v490
  %528 = vmatpush1.bf16.msra.mxu0 %v489
  %529 = vmatprep.subr.bf16.mxu0 %v488
  %530 = vmatpush1.bf16.msra.mxu0 %v487
  %531 = vmatprep.subr.bf16.mxu0 %v486
  %532 = vmatpush1.bf16.msra.mxu0 %v485
  %533 = vmatprep.subr.bf16.mxu0 0
  %534 = vmatpush2.bf16.msra.mxu0 0
  %535 = vmatprep.subr.bf16.mxu0 0
  %536 = vmatpush2.bf16.msra.mxu0 0
  %537 = vmatprep.subr.bf16.mxu0 0
  %538 = vmatpush2.bf16.msra.mxu0 0
  %539 = vmatprep.subr.bf16.mxu0 0
  %540 = vmatpush2.bf16.msra.mxu0 0
  %541 = vmatprep.subr.bf16.mxu0 0
  %542 = vmatpush2.bf16.msra.mxu0 0
  %543 = vmatprep.subr.bf16.mxu0 0
  %544 = vmatpush2.bf16.msra.mxu0 0
  %545 = vmatprep.subr.bf16.mxu0 0
  %546 = vmatpush2.bf16.msra.mxu0 0
  %547 = vmatprep.subr.bf16.mxu0 0
  %548 = vmatpush2.bf16.msra.mxu0 0
  %549 = vmatprep.mubr.bf16.mxu0 0
  %550 = vmatmul.mubr.bf16.gmra.mxu0 %v402
  %v551 = vpop.f32.mrf.mxu0
  %v552 = vadd.f32 %v430, %v551
  %v553 = vpop.f32.mrf.mxu0
  %v554 = vadd.f32 %v434, %v553
  %v555 = vpop.f32.mrf.mxu0
  %v556 = vadd.f32 %v430, %v555
  %v557 = vpop.f32.mrf.mxu0
  %v558 = vadd.f32 %v434, %v557
  %559 = vmatprep.mubr.bf16.mxu0 0
  %560 = vmatmul.mubr.bf16.gmra.mxu0 %v403
  %v561 = vpop.f32.mrf.mxu0
  %v562 = vadd.f32 %v430, %v561
  %v563 = vpop.f32.mrf.mxu0
  %v564 = vadd.f32 %v434, %v563
  %v565 = vpop.f32.mrf.mxu0
  %v566 = vadd.f32 %v430, %v565
  %v567 = vpop.f32.mrf.mxu0
  %v568 = vadd.f32 %v434, %v567
  %569 = vmatprep.mubr.bf16.mxu0 0
  %570 = vmatmul.mubr.bf16.gmra.mxu0 %v404
  %v571 = vpop.f32.mrf.mxu0
  %v572 = vadd.f32 %v430, %v571
  %v573 = vpop.f32.mrf.mxu0
  %v574 = vadd.f32 %v434, %v573
  %v575 = vpop.f32.mrf.mxu0
  %v576 = vadd.f32 %v430, %v575
  %v577 = vpop.f32.mrf.mxu0
  %v578 = vadd.f32 %v434, %v577
  %579 = vmatprep.mubr.bf16.mxu0 0
  %580 = vmatmul.mubr.bf16.gmra.mxu0 %v405
  %v581 = vpop.f32.mrf.mxu0
  %v582 = vadd.f32 %v430, %v581
  %v583 = vpop.f32.mrf.mxu0
  %v584 = vadd.f32 %v434, %v583
  %v585 = vpop.f32.mrf.mxu0
  %v586 = vadd.f32 %v430, %v585
  %v587 = vpop.f32.mrf.mxu0
  %v588 = vadd.f32 %v434, %v587
  %589 = vmatprep.mubr.bf16.mxu0 0
  %590 = vmatmul.mubr.bf16.gmra.mxu0 %v406
  %v591 = vpop.f32.mrf.mxu0
  %v592 = vadd.f32 %v430, %v591
  %v593 = vpop.f32.mrf.mxu0
  %v594 = vadd.f32 %v434, %v593
  %v595 = vpop.f32.mrf.mxu0
  %v596 = vadd.f32 %v430, %v595
  %v597 = vpop.f32.mrf.mxu0
  %v598 = vadd.f32 %v434, %v597
  %599 = vmatprep.mubr.bf16.mxu0 0
  %600 = vmatmul.mubr.bf16.gmra.mxu0 %v407
  %v601 = vpop.f32.mrf.mxu0
  %v602 = vadd.f32 %v430, %v601
  %v603 = vpop.f32.mrf.mxu0
  %v604 = vadd.f32 %v434, %v603
  %v605 = vpop.f32.mrf.mxu0
  %v606 = vadd.f32 %v430, %v605
  %v607 = vpop.f32.mrf.mxu0
  %v608 = vadd.f32 %v434, %v607
  %609 = vmatprep.mubr.bf16.mxu0 0
  %610 = vmatmul.mubr.bf16.gmra.mxu0 %v408
  %v611 = vpop.f32.mrf.mxu0
  %v612 = vadd.f32 %v430, %v611
  %v613 = vpop.f32.mrf.mxu0
  %v614 = vadd.f32 %v434, %v613
  %v615 = vpop.f32.mrf.mxu0
  %v616 = vadd.f32 %v430, %v615
  %v617 = vpop.f32.mrf.mxu0
  %v618 = vadd.f32 %v434, %v617
  %619 = vdwg.mxu0
  %v620 = vmul.f32 %v356, %v358
  %v621 = vpack.c.bf16 %v620, %v620
  %v622 = vld [vmem:[%s8] sm:$0xf]
  %v623 = vld [vmem:[%s8 + $0x4] sm:$0xf]
  %v624 = vld [vmem:[%s8 + $0x8] sm:$0xf]
  %v625 = vld [vmem:[%s8 + $0xc] sm:$0xf]
  %v626 = vld [vmem:[%s8 + $0x10] sm:$0xf]
  %v627 = vld [vmem:[%s8 + $0x14] sm:$0xf]
  %v628 = vld [vmem:[%s8 + $0x18] sm:$0xf]
  %v629 = vld [vmem:[%s8 + $0x1c] sm:$0xf]
  %v630 = vld [vmem:[%s8 + $0x20] sm:$0xf]
  %v631 = vld [vmem:[%s8 + $0x24] sm:$0xf]
  %v632 = vld [vmem:[%s8 + $0x28] sm:$0xf]
  %v633 = vld [vmem:[%s8 + $0x2c] sm:$0xf]
  %v634 = vld [vmem:[%s8 + $0x30] sm:$0xf]
  %v635 = vld [vmem:[%s8 + $0x34] sm:$0xf]
  %v636 = vld [vmem:[%s8 + $0x38] sm:$0xf]
  %v637 = vld [vmem:[%s8 + $0x3c] sm:$0xf]
  %v654 = vunpack.c.l.b16 %v622
  %v655 = vunpack.c.l.b16 %v623
  %v656 = vunpack.c.l.b16 %v624
  %v657 = vunpack.c.l.b16 %v625
  %v658 = vunpack.c.l.b16 %v626
  %v659 = vunpack.c.l.b16 %v627
  %v660 = vunpack.c.l.b16 %v628
  %v661 = vunpack.c.l.b16 %v629
  %v662 = vunpack.c.l.b16 %v630
  %v663 = vunpack.c.l.b16 %v631
  %v664 = vunpack.c.l.b16 %v632
  %v665 = vunpack.c.l.b16 %v633
  %v666 = vunpack.c.l.b16 %v634
  %v667 = vunpack.c.l.b16 %v635
  %v668 = vunpack.c.l.b16 %v636
  %v669 = vunpack.c.l.b16 %v637
  %v670 = vpack.c.b16 %v655, %v654
  %v671 = vpack.c.b16 %v657, %v656
  %v672 = vpack.c.b16 %v659, %v658
  %v673 = vpack.c.b16 %v661, %v660
  %v674 = vpack.c.b16 %v663, %v662
  %v675 = vpack.c.b16 %v665, %v664
  %v676 = vpack.c.b16 %v667, %v666
  %v677 = vpack.c.b16 %v669, %v668
  %686 = vmatprep.subr.bf16.mxu0 0
  %687 = vmatpush1.bf16.msra.mxu0 %v677
  %688 = vmatprep.subr.bf16.mxu0 0
  %689 = vmatpush1.bf16.msra.mxu0 %v676
  %690 = vmatprep.subr.bf16.mxu0 0
  %691 = vmatpush1.bf16.msra.mxu0 %v675
  %692 = vmatprep.subr.bf16.mxu0 0
  %693 = vmatpush1.bf16.msra.mxu0 %v674
  %694 = vmatprep.subr.bf16.mxu0 0
  %695 = vmatpush1.bf16.msra.mxu0 %v673
  %696 = vmatprep.subr.bf16.mxu0 0
  %697 = vmatpush1.bf16.msra.mxu0 %v672
  %698 = vmatprep.subr.bf16.mxu0 0
  %699 = vmatpush1.bf16.msra.mxu0 %v671
  %700 = vmatprep.subr.bf16.mxu0 0
  %701 = vmatpush1.bf16.msra.mxu0 %v670
  %702 = vmatprep.subr.bf16.mxu0 0
  %703 = vmatpush2.bf16.msra.mxu0 0
  %704 = vmatprep.subr.bf16.mxu0 0
  %705 = vmatpush2.bf16.msra.mxu0 0
  %706 = vmatprep.subr.bf16.mxu0 0
  %707 = vmatpush2.bf16.msra.mxu0 0
  %708 = vmatprep.subr.bf16.mxu0 0
  %709 = vmatpush2.bf16.msra.mxu0 0
  %710 = vmatprep.subr.bf16.mxu0 0
  %711 = vmatpush2.bf16.msra.mxu0 0
  %712 = vmatprep.subr.bf16.mxu0 0
  %713 = vmatpush2.bf16.msra.mxu0 0
  %714 = vmatprep.subr.bf16.mxu0 0
  %715 = vmatpush2.bf16.msra.mxu0 0
  %716 = vmatprep.subr.bf16.mxu0 0
  %717 = vmatpush2.bf16.msra.mxu0 0
  %718 = vmatprep.mubr.bf16.mxu0 0
  %719 = vmatmul.mubr.bf16.gmra.mxu0 %v621
  %v720 = vpop.f32.mrf.mxu0
  %v721 = vadd.f32 0.0, %v720
  %v722 = vpop.f32.mrf.mxu0
  %v723 = vpop.f32.mrf.mxu0
  %v724 = vpop.f32.mrf.mxu0
  %725 = vdwg.mxu0
  %v728 = vunpack.c.l.s4 1966171168
  %v729 = vunpack.c.0.s8 %v728
  %v730 = vlaneseq
  %v731 = vshrl.u32 %v730, 7
  %v732 = vsub.s32 %v729, %v731
  %v733 = vrot.slane %v356, %v732
  %v734 = vcombine.high %v733, %v733
  %v736 = vunpack.c.l.s4 1966171168
  %v737 = vunpack.c.0.s8 %v736
  %v738 = vlaneseq
  %v739 = vshrl.u32 %v738, 7
  %v740 = vsub.s32 %v737, %v739
  %v741 = vrot.slane %v733, %v740
  %v743 = vunpack.c.l.s4 1966171168
  %v744 = vunpack.c.0.s8 %v743
  %v745 = vlaneseq
  %v746 = vshrl.u32 %v745, 7
  %v747 = vsub.s32 %v744, %v746
  %v748 = vrot.slane %v734, %v747
  %v749 = vlaneseq
  %v750 = vshrl.u32 %v749, 7
  %v751 = vsub.s32 0, %v750
  %v752 = vrot.slane %v741, %v751
  %v753 = vlaneseq
  %v754 = vshrl.u32 %v753, 7
  %v755 = vsub.s32 0, %v754
  %v756 = vrot.slane %v748, %v755
  %v759 = vmul.f32 %v752, %v552
  %v760 = vmul.f32 %v752, %v556
  %v761 = vmul.f32 %v752, %v562
  %v762 = vmul.f32 %v752, %v566
  %v763 = vmul.f32 %v752, %v572
  %v764 = vmul.f32 %v752, %v576
  %v765 = vmul.f32 %v752, %v582
  %v766 = vmul.f32 %v756, %v586
  %v767 = vmul.f32 %v756, %v592
  %v768 = vmul.f32 %v756, %v596
  %v769 = vmul.f32 %v756, %v602
  %v770 = vmul.f32 %v756, %v606
  %v771 = vmul.f32 %v756, %v612
  %v772 = vmul.f32 %v756, %v616
  %v773 = vpack.c.bf16 %v760, %v759
  %v774 = vpack.c.bf16 %v762, %v761
  %v775 = vpack.c.bf16 %v764, %v763
  %v776 = vpack.c.bf16 %v766, %v765
  %v777 = vpack.c.bf16 %v768, %v767
  %v778 = vpack.c.bf16 %v770, %v769
  %v779 = vpack.c.bf16 %v772, %v771
  %780 = vmatprep.subr.bf16.mxu0 0
  %781 = vmatpush1.bf16.msra.mxu0 %v677
  %782 = vmatprep.subr.bf16.mxu0 0
  %783 = vmatpush1.bf16.msra.mxu0 %v676
  %784 = vmatprep.subr.bf16.mxu0 0
  %785 = vmatpush1.bf16.msra.mxu0 %v675
  %786 = vmatprep.subr.bf16.mxu0 0
  %787 = vmatpush1.bf16.msra.mxu0 %v674
  %788 = vmatprep.subr.bf16.mxu0 0
  %789 = vmatpush1.bf16.msra.mxu0 %v673
  %790 = vmatprep.subr.bf16.mxu0 0
  %791 = vmatpush1.bf16.msra.mxu0 %v672
  %792 = vmatprep.subr.bf16.mxu0 0
  %793 = vmatpush1.bf16.msra.mxu0 %v671
  %794 = vmatprep.subr.bf16.mxu0 0
  %795 = vmatpush1.bf16.msra.mxu0 %v670
  %796 = vmatprep.subr.bf16.mxu0 0
  %797 = vmatpush2.bf16.msra.mxu0 0
  %798 = vmatprep.subr.bf16.mxu0 0
  %799 = vmatpush2.bf16.msra.mxu0 0
  %800 = vmatprep.subr.bf16.mxu0 0
  %801 = vmatpush2.bf16.msra.mxu0 0
  %802 = vmatprep.subr.bf16.mxu0 0
  %803 = vmatpush2.bf16.msra.mxu0 0
  %804 = vmatprep.subr.bf16.mxu0 0
  %805 = vmatpush2.bf16.msra.mxu0 0
  %806 = vmatprep.subr.bf16.mxu0 0
  %807 = vmatpush2.bf16.msra.mxu0 0
  %808 = vmatprep.subr.bf16.mxu0 0
  %809 = vmatpush2.bf16.msra.mxu0 0
  %810 = vmatprep.subr.bf16.mxu0 0
  %811 = vmatpush2.bf16.msra.mxu0 0
  %812 = vmatprep.mubr.bf16.mxu0 0
  %813 = vmatmul.mubr.bf16.gmra.mxu0 %v773
  %v814 = vpop.f32.mrf.mxu0
  %v815 = vadd.f32 0.0, %v814
  %v816 = vpop.f32.mrf.mxu0
  %v817 = vpop.f32.mrf.mxu0
  %v818 = vadd.f32 0.0, %v817
  %v819 = vpop.f32.mrf.mxu0
  %820 = vmatprep.mubr.bf16.mxu0 0
  %821 = vmatmul.mubr.bf16.gmra.mxu0 %v774
  %v822 = vpop.f32.mrf.mxu0
  %v823 = vadd.f32 0.0, %v822
  %v824 = vpop.f32.mrf.mxu0
  %v825 = vpop.f32.mrf.mxu0
  %v826 = vadd.f32 0.0, %v825
  %v827 = vpop.f32.mrf.mxu0
  %828 = vmatprep.mubr.bf16.mxu0 0
  %829 = vmatmul.mubr.bf16.gmra.mxu0 %v775
  %v830 = vpop.f32.mrf.mxu0
  %v831 = vadd.f32 0.0, %v830
  %v832 = vpop.f32.mrf.mxu0
  %v833 = vpop.f32.mrf.mxu0
  %v834 = vadd.f32 0.0, %v833
  %v835 = vpop.f32.mrf.mxu0
  %836 = vmatprep.mubr.bf16.mxu0 0
  %837 = vmatmul.mubr.bf16.gmra.mxu0 %v776
  %v838 = vpop.f32.mrf.mxu0
  %v839 = vadd.f32 0.0, %v838
  %v840 = vpop.f32.mrf.mxu0
  %v841 = vpop.f32.mrf.mxu0
  %v842 = vadd.f32 0.0, %v841
  %v843 = vpop.f32.mrf.mxu0
  %844 = vmatprep.mubr.bf16.mxu0 0
  %845 = vmatmul.mubr.bf16.gmra.mxu0 %v777
  %v846 = vpop.f32.mrf.mxu0
  %v847 = vadd.f32 0.0, %v846
  %v848 = vpop.f32.mrf.mxu0
  %v849 = vpop.f32.mrf.mxu0
  %v850 = vadd.f32 0.0, %v849
  %v851 = vpop.f32.mrf.mxu0
  %852 = vmatprep.mubr.bf16.mxu0 0
  %853 = vmatmul.mubr.bf16.gmra.mxu0 %v778
  %v854 = vpop.f32.mrf.mxu0
  %v855 = vadd.f32 0.0, %v854
  %v856 = vpop.f32.mrf.mxu0
  %v857 = vpop.f32.mrf.mxu0
  %v858 = vadd.f32 0.0, %v857
  %v859 = vpop.f32.mrf.mxu0
  %860 = vmatprep.mubr.bf16.mxu0 0
  %861 = vmatmul.mubr.bf16.gmra.mxu0 %v779
  %v862 = vpop.f32.mrf.mxu0
  %v863 = vadd.f32 0.0, %v862
  %v864 = vpop.f32.mrf.mxu0
  %v865 = vpop.f32.mrf.mxu0
  %v866 = vadd.f32 0.0, %v865
  %v867 = vpop.f32.mrf.mxu0
  %868 = vdwg.mxu0
  %v869 = vlaneseq
  %v870 = vshrl.u32 %v869, 7
  %v871 = vadd.s32 %v870, 8
  %v872 = vadd.s32 %v870, 16
  %v873 = vadd.s32 %v870, 24
  %v874 = vadd.s32 %v870, 32
  %v875 = vadd.s32 %v870, 40
  %v876 = vadd.s32 %v870, 48
  %vm877 = vcmp.lt.s32.totalorder %v870, 49
  %vm878 = vcmp.lt.s32.totalorder %v871, 49
  %vm879 = vcmp.lt.s32.totalorder %v872, 49
  %vm880 = vcmp.lt.s32.totalorder %v873, 49
  %vm881 = vcmp.lt.s32.totalorder %v874, 49
  %vm882 = vcmp.lt.s32.totalorder %v875, 49
  %vm883 = vcmp.lt.s32.totalorder %v876, 49
  %v884 = vsel %vm877, %v815, -1e+30
  %v885 = vsel %vm878, %v818, -1e+30
  %v886 = vsel %vm879, %v823, -1e+30
  %v887 = vsel %vm880, %v826, -1e+30
  %v888 = vsel %vm881, %v831, -1e+30
  %v889 = vsel %vm882, %v834, -1e+30
  %v890 = vsel %vm883, %v839, -1e+30
  %v891 = vsel %vm877, %v842, -1e+30
  %v892 = vsel %vm878, %v847, -1e+30
  %v893 = vsel %vm879, %v850, -1e+30
  %v894 = vsel %vm880, %v855, -1e+30
  %v895 = vsel %vm881, %v858, -1e+30
  %v896 = vsel %vm882, %v863, -1e+30
  %v897 = vsel %vm883, %v866, -1e+30
  %v898 = vmax.f32 %v884, %v886
  %v899 = vmax.f32 %v885, %v887
  %v900 = vmax.f32 %v898, %v888
  %v901 = vmax.f32 %v899, %v889
  %v902 = vmax.f32 %v900, %v890
  %v903 = vmax.f32 %v902, %v901
  %v904 = vrot.slane %v903, 4
  %v905 = vmax.f32 %v903, %v904
  %v906 = vrot.slane %v905, 2
  %v907 = vmax.f32 %v905, %v906
  %v908 = vrot.slane %v907, 1
  %v909 = vmax.f32 %v907, %v908
  %v910 = vmax.f32 %v891, %v893
  %v911 = vmax.f32 %v892, %v894
  %v912 = vmax.f32 %v910, %v895
  %v913 = vmax.f32 %v911, %v896
  %v914 = vmax.f32 %v912, %v897
  %v915 = vmax.f32 %v914, %v913
  %v916 = vrot.slane %v915, 4
  %v917 = vmax.f32 %v915, %v916
  %v918 = vrot.slane %v917, 2
  %v919 = vmax.f32 %v917, %v918
  %v920 = vrot.slane %v919, 1
  %v921 = vmax.f32 %v919, %v920
  %v923 = vrot.slane %v721, 1
  %v926 = vmax.f32 %v909, %v721
  %v927 = vmax.f32 %v921, %v923
  %v930 = vrot.slane %v927, 7
  %v931 = vsel %vm189, %v930, %v926
  %v933 = vsub.f32 %v721, %v931
  %v934 = vmul.f32 %v933, 1.442695
  %v935 = vpow.pop %v934
  %v936 = vlaneseq
  %v937 = vshrl.u32 %v936, 7
  %v938 = vsub.s32 0, %v937
  %v939 = vrot.slane %v926, %v938
  %v940 = vlaneseq
  %v941 = vshrl.u32 %v940, 7
  %v942 = vsub.s32 0, %v941
  %v943 = vrot.slane %v927, %v942
  %v944 = vsub.f32 %v884, %v939
  %v945 = vsub.f32 %v885, %v939
  %v946 = vsub.f32 %v886, %v939
  %v947 = vsub.f32 %v887, %v939
  %v948 = vsub.f32 %v888, %v939
  %v949 = vsub.f32 %v889, %v939
  %v950 = vsub.f32 %v890, %v939
  %v951 = vsub.f32 %v891, %v943
  %v952 = vsub.f32 %v892, %v943
  %v953 = vsub.f32 %v893, %v943
  %v954 = vsub.f32 %v894, %v943
  %v955 = vsub.f32 %v895, %v943
  %v956 = vsub.f32 %v896, %v943
  %v957 = vsub.f32 %v897, %v943
  %v958 = vmul.f32 %v944, 1.442695
  %v959 = vpow.pop %v958
  %v960 = vmul.f32 %v945, 1.442695
  %v961 = vpow.pop %v960
  %v962 = vmul.f32 %v946, 1.442695
  %v963 = vpow.pop %v962
  %v964 = vmul.f32 %v947, 1.442695
  %v965 = vpow.pop %v964
  %v966 = vmul.f32 %v948, 1.442695
  %v967 = vpow.pop %v966
  %v968 = vmul.f32 %v949, 1.442695
  %v969 = vpow.pop %v968
  %v970 = vmul.f32 %v950, 1.442695
  %v971 = vpow.pop %v970
  %v972 = vmul.f32 %v951, 1.442695
  %v973 = vpow.pop %v972
  %v974 = vmul.f32 %v952, 1.442695
  %v975 = vpow.pop %v974
  %v976 = vmul.f32 %v953, 1.442695
  %v977 = vpow.pop %v976
  %v978 = vmul.f32 %v954, 1.442695
  %v979 = vpow.pop %v978
  %v980 = vmul.f32 %v955, 1.442695
  %v981 = vpow.pop %v980
  %v982 = vmul.f32 %v956, 1.442695
  %v983 = vpow.pop %v982
  %v984 = vmul.f32 %v957, 1.442695
  %v985 = vpow.pop %v984
  %v986 = vadd.f32 %v959, %v961
  %v987 = vadd.f32 %v986, %v963
  %v988 = vadd.f32 %v987, %v965
  %v989 = vadd.f32 %v988, %v967
  %v990 = vadd.f32 %v989, %v969
  %v991 = vadd.f32 %v990, %v971
  %v992 = vrot.slane %v991, 4
  %v993 = vadd.f32 %v991, %v992
  %v994 = vrot.slane %v993, 2
  %v995 = vadd.f32 %v993, %v994
  %v996 = vrot.slane %v995, 1
  %v997 = vadd.f32 %v995, %v996
  %v998 = vadd.f32 %v973, %v975
  %v999 = vadd.f32 %v998, %v977
  %v1000 = vadd.f32 %v999, %v979
  %v1001 = vadd.f32 %v1000, %v981
  %v1002 = vadd.f32 %v1001, %v983
  %v1003 = vadd.f32 %v1002, %v985
  %v1004 = vrot.slane %v1003, 4
  %v1005 = vadd.f32 %v1003, %v1004
  %v1006 = vrot.slane %v1005, 2
  %v1007 = vadd.f32 %v1005, %v1006
  %v1008 = vrot.slane %v1007, 1
  %v1009 = vadd.f32 %v1007, %v1008
  %v1012 = vsel %vm189, %v1009, %v997
  %v1014 = vadd.f32 %v935, %v1012
  %v1015 = vpack.c.bf16 %v935, %v935
  %v1016 = vld [vmem:[%s9] sm:$0xf]
  %v1017 = vld [vmem:[%s9 + $0x4] sm:$0xf]
  %v1018 = vld [vmem:[%s9 + $0x8] sm:$0xf]
  %v1019 = vld [vmem:[%s9 + $0xc] sm:$0xf]
  %v1020 = vld [vmem:[%s9 + $0x10] sm:$0xf]
  %v1021 = vld [vmem:[%s9 + $0x14] sm:$0xf]
  %v1022 = vld [vmem:[%s9 + $0x18] sm:$0xf]
  %v1023 = vld [vmem:[%s9 + $0x1c] sm:$0xf]
  %v1024 = vld [vmem:[%s9 + $0x20] sm:$0xf]
  %v1025 = vld [vmem:[%s9 + $0x24] sm:$0xf]
  %v1026 = vld [vmem:[%s9 + $0x28] sm:$0xf]
  %v1027 = vld [vmem:[%s9 + $0x2c] sm:$0xf]
  %v1028 = vld [vmem:[%s9 + $0x30] sm:$0xf]
  %v1029 = vld [vmem:[%s9 + $0x34] sm:$0xf]
  %v1030 = vld [vmem:[%s9 + $0x38] sm:$0xf]
  %v1031 = vld [vmem:[%s9 + $0x3c] sm:$0xf]
  %v1048 = vunpack.c.l.b16 %v1016
  %v1049 = vunpack.c.l.b16 %v1017
  %v1050 = vunpack.c.l.b16 %v1018
  %v1051 = vunpack.c.l.b16 %v1019
  %v1052 = vunpack.c.l.b16 %v1020
  %v1053 = vunpack.c.l.b16 %v1021
  %v1054 = vunpack.c.l.b16 %v1022
  %v1055 = vunpack.c.l.b16 %v1023
  %v1056 = vunpack.c.l.b16 %v1024
  %v1057 = vunpack.c.l.b16 %v1025
  %v1058 = vunpack.c.l.b16 %v1026
  %v1059 = vunpack.c.l.b16 %v1027
  %v1060 = vunpack.c.l.b16 %v1028
  %v1061 = vunpack.c.l.b16 %v1029
  %v1062 = vunpack.c.l.b16 %v1030
  %v1063 = vunpack.c.l.b16 %v1031
  %v1064 = vpack.c.b16 %v1049, %v1048
  %v1065 = vpack.c.b16 %v1051, %v1050
  %v1066 = vpack.c.b16 %v1053, %v1052
  %v1067 = vpack.c.b16 %v1055, %v1054
  %v1068 = vpack.c.b16 %v1057, %v1056
  %v1069 = vpack.c.b16 %v1059, %v1058
  %v1070 = vpack.c.b16 %v1061, %v1060
  %v1071 = vpack.c.b16 %v1063, %v1062
  %1080 = vmatprep.subr.bf16.mxu0 0
  %1081 = vmatpush1.bf16.msra.mxu0 %v1071
  %1082 = vmatprep.subr.bf16.mxu0 0
  %1083 = vmatpush1.bf16.msra.mxu0 %v1070
  %1084 = vmatprep.subr.bf16.mxu0 0
  %1085 = vmatpush1.bf16.msra.mxu0 %v1069
  %1086 = vmatprep.subr.bf16.mxu0 0
  %1087 = vmatpush1.bf16.msra.mxu0 %v1068
  %1088 = vmatprep.subr.bf16.mxu0 0
  %1089 = vmatpush1.bf16.msra.mxu0 %v1067
  %1090 = vmatprep.subr.bf16.mxu0 0
  %1091 = vmatpush1.bf16.msra.mxu0 %v1066
  %1092 = vmatprep.subr.bf16.mxu0 0
  %1093 = vmatpush1.bf16.msra.mxu0 %v1065
  %1094 = vmatprep.subr.bf16.mxu0 0
  %1095 = vmatpush1.bf16.msra.mxu0 %v1064
  %1096 = vmatprep.subr.bf16.mxu0 0
  %1097 = vmatpush2.bf16.msra.mxu0 0
  %1098 = vmatprep.subr.bf16.mxu0 0
  %1099 = vmatpush2.bf16.msra.mxu0 0
  %1100 = vmatprep.subr.bf16.mxu0 0
  %1101 = vmatpush2.bf16.msra.mxu0 0
  %1102 = vmatprep.subr.bf16.mxu0 0
  %1103 = vmatpush2.bf16.msra.mxu0 0
  %1104 = vmatprep.subr.bf16.mxu0 0
  %1105 = vmatpush2.bf16.msra.mxu0 0
  %1106 = vmatprep.subr.bf16.mxu0 0
  %1107 = vmatpush2.bf16.msra.mxu0 0
  %1108 = vmatprep.subr.bf16.mxu0 0
  %1109 = vmatpush2.bf16.msra.mxu0 0
  %1110 = vmatprep.subr.bf16.mxu0 0
  %1111 = vmatpush2.bf16.msra.mxu0 0
  %1112 = vmatprep.mubr.bf16.mxu0 0
  %1113 = vmatmul.mubr.bf16.gmra.mxu0 %v1015
  %v1114 = vpop.f32.mrf.mxu0
  %v1115 = vadd.f32 0.0, %v1114
  %v1116 = vpop.f32.mrf.mxu0
  %v1117 = vpop.f32.mrf.mxu0
  %v1118 = vpop.f32.mrf.mxu0
  %1119 = vdwg.mxu0
  %v1120 = vpack.c.bf16 %v961, %v959
  %v1121 = vpack.c.bf16 %v965, %v963
  %v1122 = vpack.c.bf16 %v969, %v967
  %v1123 = vpack.c.bf16 %v973, %v971
  %v1124 = vpack.c.bf16 %v977, %v975
  %v1125 = vpack.c.bf16 %v981, %v979
  %v1126 = vpack.c.bf16 %v985, %v983
  %1127 = vmatprep.subr.bf16.mxu0 0
  %1128 = vmatpush1.bf16.msra.mxu0 %v1071
  %1129 = vmatprep.subr.bf16.mxu0 0
  %1130 = vmatpush1.bf16.msra.mxu0 %v1070
  %1131 = vmatprep.subr.bf16.mxu0 0
  %1132 = vmatpush1.bf16.msra.mxu0 %v1069
  %1133 = vmatprep.subr.bf16.mxu0 0
  %1134 = vmatpush1.bf16.msra.mxu0 %v1068
  %1135 = vmatprep.subr.bf16.mxu0 0
  %1136 = vmatpush1.bf16.msra.mxu0 %v1067
  %1137 = vmatprep.subr.bf16.mxu0 0
  %1138 = vmatpush1.bf16.msra.mxu0 %v1066
  %1139 = vmatprep.subr.bf16.mxu0 0
  %1140 = vmatpush1.bf16.msra.mxu0 %v1065
  %1141 = vmatprep.subr.bf16.mxu0 0
  %1142 = vmatpush1.bf16.msra.mxu0 %v1064
  %1143 = vmatprep.subr.bf16.mxu0 0
  %1144 = vmatpush2.bf16.msra.mxu0 0
  %1145 = vmatprep.subr.bf16.mxu0 0
  %1146 = vmatpush2.bf16.msra.mxu0 0
  %1147 = vmatprep.subr.bf16.mxu0 0
  %1148 = vmatpush2.bf16.msra.mxu0 0
  %1149 = vmatprep.subr.bf16.mxu0 0
  %1150 = vmatpush2.bf16.msra.mxu0 0
  %1151 = vmatprep.subr.bf16.mxu0 0
  %1152 = vmatpush2.bf16.msra.mxu0 0
  %1153 = vmatprep.subr.bf16.mxu0 0
  %1154 = vmatpush2.bf16.msra.mxu0 0
  %1155 = vmatprep.subr.bf16.mxu0 0
  %1156 = vmatpush2.bf16.msra.mxu0 0
  %1157 = vmatprep.subr.bf16.mxu0 0
  %1158 = vmatpush2.bf16.msra.mxu0 0
  %1159 = vmatprep.mubr.bf16.mxu0 0
  %1160 = vmatmul.mubr.bf16.gmra.mxu0 %v1120
  %v1161 = vpop.f32.mrf.mxu0
  %v1162 = vadd.f32 0.0, %v1161
  %v1163 = vpop.f32.mrf.mxu0
  %v1164 = vpop.f32.mrf.mxu0
  %v1165 = vadd.f32 0.0, %v1164
  %v1166 = vpop.f32.mrf.mxu0
  %1167 = vmatprep.mubr.bf16.mxu0 0
  %1168 = vmatmul.mubr.bf16.gmra.mxu0 %v1121
  %v1169 = vpop.f32.mrf.mxu0
  %v1170 = vadd.f32 0.0, %v1169
  %v1171 = vpop.f32.mrf.mxu0
  %v1172 = vpop.f32.mrf.mxu0
  %v1173 = vadd.f32 0.0, %v1172
  %v1174 = vpop.f32.mrf.mxu0
  %1175 = vmatprep.mubr.bf16.mxu0 0
  %1176 = vmatmul.mubr.bf16.gmra.mxu0 %v1122
  %v1177 = vpop.f32.mrf.mxu0
  %v1178 = vadd.f32 0.0, %v1177
  %v1179 = vpop.f32.mrf.mxu0
  %v1180 = vpop.f32.mrf.mxu0
  %v1181 = vadd.f32 0.0, %v1180
  %v1182 = vpop.f32.mrf.mxu0
  %1183 = vmatprep.mubr.bf16.mxu0 0
  %1184 = vmatmul.mubr.bf16.gmra.mxu0 %v1123
  %v1185 = vpop.f32.mrf.mxu0
  %v1186 = vadd.f32 0.0, %v1185
  %v1187 = vpop.f32.mrf.mxu0
  %v1188 = vpop.f32.mrf.mxu0
  %v1189 = vadd.f32 0.0, %v1188
  %v1190 = vpop.f32.mrf.mxu0
  %1191 = vmatprep.mubr.bf16.mxu0 0
  %1192 = vmatmul.mubr.bf16.gmra.mxu0 %v1124
  %v1193 = vpop.f32.mrf.mxu0
  %v1194 = vadd.f32 0.0, %v1193
  %v1195 = vpop.f32.mrf.mxu0
  %v1196 = vpop.f32.mrf.mxu0
  %v1197 = vadd.f32 0.0, %v1196
  %v1198 = vpop.f32.mrf.mxu0
  %1199 = vmatprep.mubr.bf16.mxu0 0
  %1200 = vmatmul.mubr.bf16.gmra.mxu0 %v1125
  %v1201 = vpop.f32.mrf.mxu0
  %v1202 = vadd.f32 0.0, %v1201
  %v1203 = vpop.f32.mrf.mxu0
  %v1204 = vpop.f32.mrf.mxu0
  %v1205 = vadd.f32 0.0, %v1204
  %v1206 = vpop.f32.mrf.mxu0
  %1207 = vmatprep.mubr.bf16.mxu0 0
  %1208 = vmatmul.mubr.bf16.gmra.mxu0 %v1126
  %v1209 = vpop.f32.mrf.mxu0
  %v1210 = vadd.f32 0.0, %v1209
  %v1211 = vpop.f32.mrf.mxu0
  %v1212 = vpop.f32.mrf.mxu0
  %v1213 = vadd.f32 0.0, %v1212
  %v1214 = vpop.f32.mrf.mxu0
  %1215 = vdwg.mxu0
  %v1216 = vmul.f32 %v1115, %v397
  %v1217 = vmul.f32 %v1162, %v554
  %v1218 = vmul.f32 %v1165, %v558
  %v1219 = vmul.f32 %v1170, %v564
  %v1220 = vmul.f32 %v1173, %v568
  %v1221 = vmul.f32 %v1178, %v574
  %v1222 = vmul.f32 %v1181, %v578
  %v1223 = vmul.f32 %v1186, %v584
  %v1224 = vmul.f32 %v1189, %v588
  %v1225 = vmul.f32 %v1194, %v594
  %v1226 = vmul.f32 %v1197, %v598
  %v1227 = vmul.f32 %v1202, %v604
  %v1228 = vmul.f32 %v1205, %v608
  %v1229 = vmul.f32 %v1210, %v614
  %v1230 = vmul.f32 %v1213, %v618
  %v1231 = vadd.f32 %v1217, %v1218
  %v1232 = vadd.f32 %v1231, %v1219
  %v1233 = vadd.f32 %v1232, %v1220
  %v1234 = vadd.f32 %v1233, %v1221
  %v1235 = vadd.f32 %v1234, %v1222
  %v1236 = vadd.f32 %v1235, %v1223
  %v1237 = vrot.slane %v1236, 4
  %v1238 = vadd.f32 %v1236, %v1237
  %v1239 = vrot.slane %v1238, 2
  %v1240 = vadd.f32 %v1238, %v1239
  %v1241 = vrot.slane %v1240, 1
  %v1242 = vadd.f32 %v1240, %v1241
  %v1243 = vadd.f32 %v1224, %v1225
  %v1244 = vadd.f32 %v1243, %v1226
  %v1245 = vadd.f32 %v1244, %v1227
  %v1246 = vadd.f32 %v1245, %v1228
  %v1247 = vadd.f32 %v1246, %v1229
  %v1248 = vadd.f32 %v1247, %v1230
  %v1249 = vrot.slane %v1248, 4
  %v1250 = vadd.f32 %v1248, %v1249
  %v1251 = vrot.slane %v1250, 2
  %v1252 = vadd.f32 %v1250, %v1251
  %v1253 = vrot.slane %v1252, 1
  %v1254 = vadd.f32 %v1252, %v1253
  %v1257 = vsel %vm189, %v1254, %v1242
  %v1259 = vadd.f32 %v1216, %v1257
  %v1260 = vrcp.pop %v1014
  %v1261 = vpack.c.bf16 %v1260, %v1260
  %1262 = vmatprep.subr.bf16.mxu0 0
  %1263 = vmatpush1.bf16.msra.mxu0 %v1071
  %1264 = vmatprep.subr.bf16.mxu0 0
  %1265 = vmatpush1.bf16.msra.mxu0 %v1070
  %1266 = vmatprep.subr.bf16.mxu0 0
  %1267 = vmatpush1.bf16.msra.mxu0 %v1069
  %1268 = vmatprep.subr.bf16.mxu0 0
  %1269 = vmatpush1.bf16.msra.mxu0 %v1068
  %1270 = vmatprep.subr.bf16.mxu0 0
  %1271 = vmatpush1.bf16.msra.mxu0 %v1067
  %1272 = vmatprep.subr.bf16.mxu0 0
  %1273 = vmatpush1.bf16.msra.mxu0 %v1066
  %1274 = vmatprep.subr.bf16.mxu0 0
  %1275 = vmatpush1.bf16.msra.mxu0 %v1065
  %1276 = vmatprep.subr.bf16.mxu0 0
  %1277 = vmatpush1.bf16.msra.mxu0 %v1064
  %1278 = vmatprep.subr.bf16.mxu0 0
  %1279 = vmatpush2.bf16.msra.mxu0 0
  %1280 = vmatprep.subr.bf16.mxu0 0
  %1281 = vmatpush2.bf16.msra.mxu0 0
  %1282 = vmatprep.subr.bf16.mxu0 0
  %1283 = vmatpush2.bf16.msra.mxu0 0
  %1284 = vmatprep.subr.bf16.mxu0 0
  %1285 = vmatpush2.bf16.msra.mxu0 0
  %1286 = vmatprep.subr.bf16.mxu0 0
  %1287 = vmatpush2.bf16.msra.mxu0 0
  %1288 = vmatprep.subr.bf16.mxu0 0
  %1289 = vmatpush2.bf16.msra.mxu0 0
  %1290 = vmatprep.subr.bf16.mxu0 0
  %1291 = vmatpush2.bf16.msra.mxu0 0
  %1292 = vmatprep.subr.bf16.mxu0 0
  %1293 = vmatpush2.bf16.msra.mxu0 0
  %1294 = vmatprep.mubr.bf16.mxu0 0
  %1295 = vmatmul.mubr.bf16.gmra.mxu0 %v1261
  %v1296 = vpop.f32.mrf.mxu0
  %v1297 = vadd.f32 0.0, %v1296
  %v1298 = vpop.f32.mrf.mxu0
  %v1299 = vpop.f32.mrf.mxu0
  %v1300 = vpop.f32.mrf.mxu0
  %1301 = vdwg.mxu0
  %v1302 = vmul.f32 %v1259, %v1297
  %v1303 = vpack.c.bf16 %v1302, %v1302
  %v1304 = vld [vmem:[%s10] sm:$0xf]
  %v1305 = vld [vmem:[%s10 + $0x4] sm:$0xf]
  %v1306 = vld [vmem:[%s10 + $0x8] sm:$0xf]
  %v1307 = vld [vmem:[%s10 + $0xc] sm:$0xf]
  %v1308 = vld [vmem:[%s10 + $0x10] sm:$0xf]
  %v1309 = vld [vmem:[%s10 + $0x14] sm:$0xf]
  %v1310 = vld [vmem:[%s10 + $0x18] sm:$0xf]
  %v1311 = vld [vmem:[%s10 + $0x1c] sm:$0xf]
  %v1312 = vld [vmem:[%s10 + $0x20] sm:$0xf]
  %v1313 = vld [vmem:[%s10 + $0x24] sm:$0xf]
  %v1314 = vld [vmem:[%s10 + $0x28] sm:$0xf]
  %v1315 = vld [vmem:[%s10 + $0x2c] sm:$0xf]
  %v1316 = vld [vmem:[%s10 + $0x30] sm:$0xf]
  %v1317 = vld [vmem:[%s10 + $0x34] sm:$0xf]
  %v1318 = vld [vmem:[%s10 + $0x38] sm:$0xf]
  %v1319 = vld [vmem:[%s10 + $0x3c] sm:$0xf]
  %v1320 = vld [vmem:[%s11] sm:$0x1]
  %v1322 = vlaneseq
  %v1323 = vshrl.u32 %v1322, 7
  %v1324 = vsub.s32 0, %v1323
  %v1325 = vrot.slane %v1320, %v1324
  %v1343 = vunpack.c.l.b16 %v1304
  %v1344 = vunpack.c.l.b16 %v1305
  %v1345 = vunpack.c.l.b16 %v1306
  %v1346 = vunpack.c.l.b16 %v1307
  %v1347 = vunpack.c.l.b16 %v1308
  %v1348 = vunpack.c.l.b16 %v1309
  %v1349 = vunpack.c.l.b16 %v1310
  %v1350 = vunpack.c.l.b16 %v1311
  %v1351 = vunpack.c.l.b16 %v1312
  %v1352 = vunpack.c.l.b16 %v1313
  %v1353 = vunpack.c.l.b16 %v1314
  %v1354 = vunpack.c.l.b16 %v1315
  %v1355 = vunpack.c.l.b16 %v1316
  %v1356 = vunpack.c.l.b16 %v1317
  %v1357 = vunpack.c.l.b16 %v1318
  %v1358 = vunpack.c.l.b16 %v1319
  %v1359 = vpack.c.b16 %v1344, %v1343
  %v1360 = vpack.c.b16 %v1346, %v1345
  %v1361 = vpack.c.b16 %v1348, %v1347
  %v1362 = vpack.c.b16 %v1350, %v1349
  %v1363 = vpack.c.b16 %v1352, %v1351
  %v1364 = vpack.c.b16 %v1354, %v1353
  %v1365 = vpack.c.b16 %v1356, %v1355
  %v1366 = vpack.c.b16 %v1358, %v1357
  %1375 = vmatprep.subr.bf16.mxu0 0
  %1376 = vmatpush1.bf16.msra.mxu0 %v1366
  %1377 = vmatprep.subr.bf16.mxu0 0
  %1378 = vmatpush1.bf16.msra.mxu0 %v1365
  %1379 = vmatprep.subr.bf16.mxu0 0
  %1380 = vmatpush1.bf16.msra.mxu0 %v1364
  %1381 = vmatprep.subr.bf16.mxu0 0
  %1382 = vmatpush1.bf16.msra.mxu0 %v1363
  %1383 = vmatprep.subr.bf16.mxu0 0
  %1384 = vmatpush1.bf16.msra.mxu0 %v1362
  %1385 = vmatprep.subr.bf16.mxu0 0
  %1386 = vmatpush1.bf16.msra.mxu0 %v1361
  %1387 = vmatprep.subr.bf16.mxu0 0
  %1388 = vmatpush1.bf16.msra.mxu0 %v1360
  %1389 = vmatprep.subr.bf16.mxu0 0
  %1390 = vmatpush1.bf16.msra.mxu0 %v1359
  %1391 = vmatprep.subr.bf16.mxu0 0
  %1392 = vmatpush2.bf16.msra.mxu0 0
  %1393 = vmatprep.subr.bf16.mxu0 0
  %1394 = vmatpush2.bf16.msra.mxu0 0
  %1395 = vmatprep.subr.bf16.mxu0 0
  %1396 = vmatpush2.bf16.msra.mxu0 0
  %1397 = vmatprep.subr.bf16.mxu0 0
  %1398 = vmatpush2.bf16.msra.mxu0 0
  %1399 = vmatprep.subr.bf16.mxu0 0
  %1400 = vmatpush2.bf16.msra.mxu0 0
  %1401 = vmatprep.subr.bf16.mxu0 0
  %1402 = vmatpush2.bf16.msra.mxu0 0
  %1403 = vmatprep.subr.bf16.mxu0 0
  %1404 = vmatpush2.bf16.msra.mxu0 0
  %1405 = vmatprep.subr.bf16.mxu0 0
  %1406 = vmatpush2.bf16.msra.mxu0 0
  %1407 = vmatprep.mubr.bf16.mxu0 0
  %1408 = vmatmul.mubr.bf16.gmra.mxu0 %v1303
  %v1409 = vpop.f32.mrf.mxu0
  %v1410 = vadd.f32 %v1325, %v1409
  %v1411 = vpop.f32.mrf.mxu0
  %v1412 = vpop.f32.mrf.mxu0
  %v1413 = vpop.f32.mrf.mxu0
  %1414 = vdwg.mxu0
  %v1415 = vmul.f32 %v1410, %v1410
  %vm1416 = vcmask 517120
  %v1417 = vsel %vm1416, %v1415, 0.0
  %1418 = vadd.xlane.f32.xlu0 %v1417
  %v1419 = vpop.xlane.xlu0 %1418
  %v1420 = vrsqrt.pop %v1419
  %v1421 = vmul.f32 %v1410, %v1420
  %s1422 = sld [smem:[#allocation2]]
  %v1423 = vpack.c.bf16 %v1421, %v1421
  %v1424 = vld [vmem:[%s12] sm:$0xf]
  %v1425 = vld [vmem:[%s12 + $0x4] sm:$0xf]
  %v1426 = vld [vmem:[%s12 + $0x8] sm:$0xf]
  %v1427 = vld [vmem:[%s12 + $0xc] sm:$0xf]
  %v1428 = vld [vmem:[%s12 + $0x10] sm:$0xf]
  %v1429 = vld [vmem:[%s12 + $0x14] sm:$0xf]
  %v1430 = vld [vmem:[%s12 + $0x18] sm:$0xf]
  %v1431 = vld [vmem:[%s12 + $0x1c] sm:$0xf]
  %v1440 = vunpack.c.l.b16 %v1424
  %v1441 = vunpack.c.l.b16 %v1425
  %v1442 = vunpack.c.l.b16 %v1426
  %v1443 = vunpack.c.l.b16 %v1427
  %v1444 = vunpack.c.l.b16 %v1428
  %v1445 = vunpack.c.l.b16 %v1429
  %v1446 = vunpack.c.l.b16 %v1430
  %v1447 = vunpack.c.l.b16 %v1431
  %v1448 = vpack.c.b16 %v1441, %v1440
  %v1449 = vpack.c.b16 %v1443, %v1442
  %v1450 = vpack.c.b16 %v1445, %v1444
  %v1451 = vpack.c.b16 %v1447, %v1446
  %vm1456 = vcmask 523264
  %v1458 = vsel %vm1456, %v1423, 0
  %1460 = vmatprep.subr.bf16.mxu0 0
  %1461 = vmatpush1.bf16.msra.mxu0 0
  %1462 = vmatprep.subr.bf16.mxu0 0
  %1463 = vmatpush1.bf16.msra.mxu0 0
  %1464 = vmatprep.subr.bf16.mxu0 0
  %1465 = vmatpush1.bf16.msra.mxu0 0
  %1466 = vmatprep.subr.bf16.mxu0 0
  %1467 = vmatpush1.bf16.msra.mxu0 0
  %1468 = vmatprep.subr.bf16.mxu0 0
  %1469 = vmatpush1.bf16.msra.mxu0 %v1451
  %1470 = vmatprep.subr.bf16.mxu0 0
  %1471 = vmatpush1.bf16.msra.mxu0 %v1450
  %1472 = vmatprep.subr.bf16.mxu0 0
  %1473 = vmatpush1.bf16.msra.mxu0 %v1449
  %1474 = vmatprep.subr.bf16.mxu0 0
  %1475 = vmatpush1.bf16.msra.mxu0 %v1448
  %1476 = vmatprep.subr.bf16.mxu0 0
  %1477 = vmatpush2.bf16.msra.mxu0 0
  %1478 = vmatprep.subr.bf16.mxu0 0
  %1479 = vmatpush2.bf16.msra.mxu0 0
  %1480 = vmatprep.subr.bf16.mxu0 0
  %1481 = vmatpush2.bf16.msra.mxu0 0
  %1482 = vmatprep.subr.bf16.mxu0 0
  %1483 = vmatpush2.bf16.msra.mxu0 0
  %1484 = vmatprep.subr.bf16.mxu0 0
  %1485 = vmatpush2.bf16.msra.mxu0 0
  %1486 = vmatprep.subr.bf16.mxu0 0
  %1487 = vmatpush2.bf16.msra.mxu0 0
  %1488 = vmatprep.subr.bf16.mxu0 0
  %1489 = vmatpush2.bf16.msra.mxu0 0
  %1490 = vmatprep.subr.bf16.mxu0 0
  %1491 = vmatpush2.bf16.msra.mxu0 0
  %1492 = vmatprep.mubr.bf16.mxu0 0
  %1493 = vmatmul.mubr.bf16.gmra.mxu0 %v1458
  %v1494 = vpop.f32.mrf.mxu0
  %v1495 = vadd.f32 0.0, %v1494
  %v1496 = vpop.f32.mrf.mxu0
  %v1497 = vpop.f32.mrf.mxu0
  %v1498 = vpop.f32.mrf.mxu0
  %1499 = vdwg.mxu0
  %v1500 = vstv %s1422
  %v1501 = vmul.f32 %v1500, %v1495
  %v1502 = vlaneseq
  %v1503 = vand.u32 %v1502, 127
  %vm1504 = vcmp.lt.s32.totalorder %v1503, 10
  %v1505 = vsel %vm1504, %v1501, -1e+30
  %vm1506 = vcmask 1041408
  %v1507 = vsel %vm1506, %v1505, -inf
  %1508 = vmax.xlane.f32.xlu0 %v1507
  %v1509 = vpop.xlane.xlu0 %1508
  %v1510 = vsub.f32 %v1505, %v1509
  %v1511 = vmul.f32 %v1510, 1.442695
  %v1512 = vpow.pop %v1511
  %v1513 = vsel %vm1506, %v1512, 0.0
  %1514 = vadd.xlane.f32.xlu0 %v1513
  %v1515 = vpop.xlane.xlu0 %1514
  %v1516 = vlog2.pop %v1515
  %v1517 = vmul.f32 %v1516, 0.6931472
  %v1518 = vadd.f32 %v1509, %v1517
  %v1519 = vld [vmem:[%s1] sm:$0x3]
  %1520 = vset.pattern.permute.xlu0 0
  %1521 = vperm.xlu0 %1520, %v1519
  %v1522 = vpop.permute.xlu0 %1521
  %vm1523 = vcmp.eq.s32.totalorder %v1503, %v1522
  %v1524 = vsel %vm1523, %v1501, 0.0
  %v1525 = vsel %vm1506, %v1524, 0.0
  %1526 = vadd.xlane.f32.xlu0 %v1525
  %v1527 = vpop.xlane.xlu0 %1526
  %v1528 = vsub.f32 %v1518, %v1527
  %vm1529 = vcmp.eq.s32.totalorder %v1503, 10
  %v1530 = vsel %vm1529, %v1528, %v1501
  %1531 = vst [vmem:[%s14] sm:$0x3] %v1530
  // Predicated region
  $region58: #{object_centric_eval.1} parent=0 // pred_check
    _
  $region59: #{object_centric_eval.1} parent=0 // pred_check_branch
    %1533 = sbr.rel (0) target = $region61
  $region60: #{object_centric_eval.1} parent=0 // pred_region
    _
  $region61: #{object_centric_eval.1} parent=0 // pred_fallthru
    _
  // Predicated region
  $region62: #{object_centric_eval.1} parent=0 // pred_check
    _
  $region63: #{object_centric_eval.1} parent=0 // pred_check_branch
    %1535 = sbr.rel (0) target = $region65
  $region64: #{object_centric_eval.1} parent=0 // pred_region
    _
  $region65: #{object_centric_eval.1} parent=0 // pred_fallthru
    _

</llo_original>
